<compile_context>
chip_gen: v7x
topology: tpu7x:2x2x1
jax: 0.10.0
libtpu: 0.0.40
codegen_flags: <defaults>
</compile_context>

<pallas_src>
import functools

import jax
import jax.numpy as jnp
from jax.experimental import pallas as pl
from jax.experimental.pallas import tpu as pltpu


def _round_up(a, b):
    return (a + b - 1) // b * b


def _conv_projector_kernel(x_ref, wc_ref, shift_ref, w1_ref, b1_ref,
                           w2_ref, b2_ref, o_ref, acc_ref, *, inv_hw):
    # x_ref:    (TB, THW, C)  bf16
    # wc_ref:   (C, C)        bf16   (BN scale folded in)
    # shift_ref:(1, C)        f32    (conv bias + BN shift folded)
    # w1_ref:   (C, C) bf16   b1_ref:(1, C) f32 (spatial-pad correction folded)
    # w2_ref:   (C, F) bf16   b2_ref:(1, F) f32
    # o_ref:    (TB, F) f32   acc_ref: (TB, C) f32 scratch (pooled sum)
    k = pl.program_id(1)

    @pl.when(k == 0)
    def _init():
        acc_ref[...] = jnp.zeros_like(acc_ref)

    tb, thw, c = x_ref.shape
    # Layout-free reshape: thw % 8 == 0 and c % 128 == 0, so tile boundaries match.
    x = x_ref[...].reshape(tb * thw, c)

    # 1x1 conv over channels on the MXU (bf16 in, f32 accumulate).
    y = jnp.dot(x, wc_ref[...], preferred_element_type=jnp.float32)
    # Folded BN affine shift + ReLU.
    y = jnp.maximum(y + shift_ref[...], 0.0)

    # Accumulate the spatial sum for the adaptive average pool.
    acc_ref[...] += jnp.sum(y.reshape(tb, thw, c), axis=1)

    @pl.when(k == pl.num_programs(1) - 1)
    def _finalize():
        pooled = acc_ref[...] * inv_hw                           # (TB, C) f32 mean
        h = jnp.dot(pooled.astype(jnp.bfloat16), w1_ref[...],
                    preferred_element_type=jnp.float32) + b1_ref[...]
        h = jnp.maximum(h, 0.0)
        out = jnp.dot(h.astype(jnp.bfloat16), w2_ref[...],
                      preferred_element_type=jnp.float32) + b2_ref[...]
        o_ref[...] = out.astype(o_ref.dtype)


def conv_projector(x_nchw, params, *, tb=None, thw=None):
    """x_nchw: (B, C, H, W) float32.  Returns (B, out_features) float32."""
    B, C, H, W = x_nchw.shape
    F = params["w2"].shape[1]
    HW = H * W

    # ---- lane-dense padding of channel / feature dims -----------------------
    C_pad = _round_up(C, 128)
    F_pad = _round_up(F, 128)

    # ---- tile sizes ----------------------------------------------------------
    if tb is None:
        tb = min(_round_up(B, 8), 8)          # batch rows per grid step
    B_pad = _round_up(B, tb)
    if thw is None:
        thw = min(_round_up(HW, 8), 512)      # spatial rows per grid step
    HW_pad = _round_up(HW, thw)

    # ---- fold BatchNorm (eval mode) into the 1x1-conv weight and bias -------
    eps = 1e-5
    bn_scale = params["bn_gamma"] / jnp.sqrt(params["bn_var"] + eps)       # (C,)
    wc_f = params["wc"] * bn_scale[None, :]                                # (C, C)
    shift_f = (params["bc"] - params["bn_mean"]) * bn_scale + params["bn_beta"]

    def pad2(a, r, c):
        return jnp.pad(a, ((0, r - a.shape[0]), (0, c - a.shape[1])))

    def pad1(a, n):
        return jnp.pad(a, (0, n - a.shape[0]))

    wc_p = pad2(wc_f, C_pad, C_pad).astype(jnp.bfloat16)
    shift_p = pad1(shift_f, C_pad).astype(jnp.float32)                     # (C_pad,)
    w1_p32 = pad2(params["w1"], C_pad, C_pad).astype(jnp.float32)
    b1_p = pad1(params["b1"], C_pad).astype(jnp.float32)
    w2_p = pad2(params["w2"], C_pad, F_pad).astype(jnp.bfloat16)
    b2_p = pad1(params["b2"], F_pad).astype(jnp.float32)

    # Spatial zero-padding correction: each zero-padded spatial row contributes
    # exactly relu(shift) to the pooled sum; fold the compensation into b1.
    n_pad = HW_pad - HW
    corr = (-float(n_pad) / float(HW)) * jnp.maximum(shift_p, 0.0)         # (C_pad,)
    b1_eff = b1_p + corr @ w1_p32
    w1_p = w1_p32.astype(jnp.bfloat16)

    # ---- input layout: NCHW -> (B, HW, C), pad, cast to bf16 ----------------
    x = jnp.transpose(x_nchw, (0, 2, 3, 1)).reshape(B, HW, C)
    x = jnp.pad(x, ((0, B_pad - B), (0, HW_pad - HW), (0, C_pad - C)))
    x = x.astype(jnp.bfloat16)

    grid = (B_pad // tb, HW_pad // thw)
    kernel = functools.partial(_conv_projector_kernel, inv_hw=1.0 / float(HW))

    out = pl.pallas_call(
        kernel,
        out_shape=jax.ShapeDtypeStruct((B_pad, F_pad), jnp.float32),
        grid_spec=pltpu.PrefetchScalarGridSpec(
            num_scalar_prefetch=0,
            grid=grid,
            in_specs=[
                pl.BlockSpec((tb, thw, C_pad), lambda i, k: (i, k, 0)),   # x tile
                pl.BlockSpec((C_pad, C_pad), lambda i, k: (0, 0)),        # wc (resident)
                pl.BlockSpec((1, C_pad), lambda i, k: (0, 0)),            # shift
                pl.BlockSpec((C_pad, C_pad), lambda i, k: (0, 0)),        # w1 (resident)
                pl.BlockSpec((1, C_pad), lambda i, k: (0, 0)),            # b1
                pl.BlockSpec((C_pad, F_pad), lambda i, k: (0, 0)),        # w2 (resident)
                pl.BlockSpec((1, F_pad), lambda i, k: (0, 0)),            # b2
            ],
            out_specs=pl.BlockSpec((tb, F_pad), lambda i, k: (i, 0)),
            scratch_shapes=[pltpu.VMEM((tb, C_pad), jnp.float32)],        # pooled-sum acc
        ),
        compiler_params=pltpu.CompilerParams(
            dimension_semantics=("parallel", "arbitrary"),
            vmem_limit_bytes=48 * 1024 * 1024,   # explicit; safe on v5e/v6e/v7x
        ),
    )(x, wc_p, shift_p.reshape(1, C_pad), w1_p, b1_eff.reshape(1, C_pad),
      w2_p, b2_p.reshape(1, F_pad))

    return out[:B, :F]


def _reference(x_nchw, params):
    """Pure-JAX f32 reference of the same forward pass (eval-mode BN)."""
    B, C, H, W = x_nchw.shape
    eps = 1e-5
    x = jnp.transpose(x_nchw, (0, 2, 3, 1)).reshape(B, H * W, C)
    y = x @ params["wc"] + params["bc"]
    scale = params["bn_gamma"] / jnp.sqrt(params["bn_var"] + eps)
    shift = params["bn_beta"] - params["bn_mean"] * scale
    y = jnp.maximum(y * scale + shift, 0.0)
    pooled = jnp.mean(y, axis=1)
    h = jnp.maximum(pooled @ params["w1"] + params["b1"], 0.0)
    return h @ params["w2"] + params["b2"]


def init_params(key, in_features, out_features):
    ks = jax.random.split(key, 8)
    C, F = in_features, out_features
    # Conv2d(C, C, 1) weight (C_out, C_in, 1, 1) stored transposed as (C_in, C_out).
    wc = jax.random.normal(ks[0], (C, C), jnp.float32) * 0.1
    bc = jax.random.normal(ks[1], (C,), jnp.float32) * 0.1
    # BatchNorm2d(C) parameters / running stats.
    bn_gamma = 1.0 + 0.1 * jax.random.normal(ks[2], (C,), jnp.float32)
    bn_beta = 0.1 * jax.random.normal(ks[3], (C,), jnp.float32)
    bn_mean = 0.1 * jax.random.normal(ks[4], (C,), jnp.float32)
    bn_var = jnp.abs(1.0 + 0.1 * jax.random.normal(ks[5], (C,), jnp.float32))
    # Linear(C, C) and Linear(C, F), weights stored as (in, out).
    w1 = jax.random.normal(ks[6], (C, C), jnp.float32) * 0.1
    b1 = jnp.zeros((C,), jnp.float32)
    w2 = jax.random.normal(ks[7], (C, F), jnp.float32) * 0.1
    b2 = jnp.zeros((F,), jnp.float32)
    return dict(wc=wc, bc=bc, bn_gamma=bn_gamma, bn_beta=bn_beta,
                bn_mean=bn_mean, bn_var=bn_var, w1=w1, b1=b1, w2=w2, b2=b2)


if __name__ == "__main__":
    B, C, H, W = 2, 4, 16, 16
    out_features = 8

    key = jax.random.PRNGKey(0)
    k_x, k_p = jax.random.split(key)
    x = jax.random.normal(k_x, (B, C, H, W), jnp.float32)
    params = init_params(k_p, C, out_features)

    out = conv_projector(x, params)
    out = jax.block_until_ready(out)

    ref = _reference(x, params)
    assert out.shape == (B, out_features), out.shape
    # bf16 MXU inputs (f32 accumulation) vs. pure-f32 reference -> loose tolerance.
    max_err = float(jnp.max(jnp.abs(out - ref)))
    assert max_err < 2e-2, (max_err, out, ref)

    print("KERNEL_OK")
</pallas_src>

<mosaic_0001>
module attributes {stable_mosaic.version = 11 : i64} {
  func.func @_conv_projector_kernel(%arg0: i32, %arg1: i32, %arg2: memref<8x256x128xbf16, #tpu.memory_space<vmem>>, %arg3: memref<128x128xbf16, #tpu.memory_space<vmem>>, %arg4: memref<1x128xf32, #tpu.memory_space<vmem>>, %arg5: memref<128x128xbf16, #tpu.memory_space<vmem>>, %arg6: memref<1x128xf32, #tpu.memory_space<vmem>>, %arg7: memref<128x128xbf16, #tpu.memory_space<vmem>>, %arg8: memref<1x128xf32, #tpu.memory_space<vmem>>, %arg9: memref<8x128xf32, #tpu.memory_space<vmem>>, %arg10: memref<8x128xf32, #tpu.memory_space<vmem>>) attributes {dimension_semantics = [#tpu.dimension_semantics<parallel>, #tpu.dimension_semantics<arbitrary>], iteration_bounds = array<i64: 1, 1>, scalar_prefetch = 0 : i64, scratch_operands = 1 : i64, tpu.core_type = #tpu.core_type<tc>, window_params = [{transform_indices = @transform_0, window_bounds = array<i64: 8, 256, 128>}, {pipeline_mode = #tpu.pipeline_mode<synchronous>, transform_indices = @transform_1, window_bounds = array<i64: 128, 128>}, {pipeline_mode = #tpu.pipeline_mode<synchronous>, transform_indices = @transform_2, window_bounds = array<i64: 1, 128>}, {pipeline_mode = #tpu.pipeline_mode<synchronous>, transform_indices = @transform_3, window_bounds = array<i64: 128, 128>}, {pipeline_mode = #tpu.pipeline_mode<synchronous>, transform_indices = @transform_4, window_bounds = array<i64: 1, 128>}, {pipeline_mode = #tpu.pipeline_mode<synchronous>, transform_indices = @transform_5, window_bounds = array<i64: 128, 128>}, {pipeline_mode = #tpu.pipeline_mode<synchronous>, transform_indices = @transform_6, window_bounds = array<i64: 1, 128>}, {transform_indices = @transform_7, window_bounds = array<i64: 8, 128>}]} {
    %c0_i32 = arith.constant 0 : i32
    %0 = arith.cmpi eq, %arg1, %c0_i32 : i32
    %1 = arith.extui %0 : i1 to i32
    %c0_i32_0 = arith.constant 0 : i32
    %2 = arith.cmpi ne, %1, %c0_i32_0 : i32
    scf.if %2 {
      %cst_15 = arith.constant 0.000000e+00 : f32
      %20 = vector.broadcast %cst_15 : f32 to vector<8x128xf32>
      %c0_16 = arith.constant 0 : index
      %c0_17 = arith.constant 0 : index
      %21 = vector.load %arg10[%c0_16, %c0_17] : memref<8x128xf32, #tpu.memory_space<vmem>>, vector<8x128xf32>
      tpu.vector_store %arg10[%c0_16, %c0_17], %20 {strides = array<i32>} : memref<8x128xf32, #tpu.memory_space<vmem>>, vector<8x128xf32>,
    } else {
    }
    %c0 = arith.constant 0 : index
    %c0_1 = arith.constant 0 : index
    %c0_2 = arith.constant 0 : index
    %3 = vector.load %arg2[%c0, %c0_1, %c0_2] : memref<8x256x128xbf16, #tpu.memory_space<vmem>>, vector<8x256x128xbf16>
    %4 = vector.shape_cast %3 : vector<8x256x128xbf16> to vector<2048x128xbf16>
    %c0_3 = arith.constant 0 : index
    %c0_4 = arith.constant 0 : index
    %5 = vector.load %arg3[%c0_3, %c0_4] : memref<128x128xbf16, #tpu.memory_space<vmem>>, vector<128x128xbf16>
    %cst = arith.constant dense<0.000000e+00> : vector<2048x128xf32>
    %6 = tpu.matmul %4, %5, %cst {dimension_numbers = #tpu.dot_dimension_numbers<[1], [0], [0], [1], [0, 0, 1, 1], [], []>} : vector<2048x128xbf16>, vector<128x128xbf16>, vector<2048x128xf32> -> vector<2048x128xf32>
    %c0_5 = arith.constant 0 : index
    %c0_6 = arith.constant 0 : index
    %7 = vector.load %arg4[%c0_5, %c0_6] : memref<1x128xf32, #tpu.memory_space<vmem>>, vector<1x128xf32>
    %8 = vector.broadcast %7 : vector<1x128xf32> to vector<2048x128xf32>
    %9 = arith.addf %6, %8 : vector<2048x128xf32>
    %cst_7 = arith.constant 0.000000e+00 : f32
    %10 = vector.broadcast %cst_7 : f32 to vector<2048x128xf32>
    %11 = arith.maximumf %9, %10 : vector<2048x128xf32>
    %c0_8 = arith.constant 0 : index
    %c0_9 = arith.constant 0 : index
    %12 = vector.load %arg10[%c0_8, %c0_9] : memref<8x128xf32, #tpu.memory_space<vmem>>, vector<8x128xf32>
    %13 = vector.shape_cast %11 : vector<2048x128xf32> to vector<8x256x128xf32>
    %cst_10 = arith.constant dense<0.000000e+00> : vector<8x128xf32>
    %14 = vector.multi_reduction <add>, %13, %cst_10 [1] : vector<8x256x128xf32> to vector<8x128xf32>
    %15 = arith.addf %12, %14 : vector<8x128xf32>
    %c0_11 = arith.constant 0 : index
    %c0_12 = arith.constant 0 : index
    %16 = vector.load %arg10[%c0_11, %c0_12] : memref<8x128xf32, #tpu.memory_space<vmem>>, vector<8x128xf32>
    tpu.vector_store %arg10[%c0_11, %c0_12], %15 {strides = array<i32>} : memref<8x128xf32, #tpu.memory_space<vmem>>, vector<8x128xf32>,
    %c0_i32_13 = arith.constant 0 : i32
    %17 = arith.cmpi eq, %arg1, %c0_i32_13 : i32
    %18 = arith.extui %17 : i1 to i32
    %c0_i32_14 = arith.constant 0 : i32
    %19 = arith.cmpi ne, %18, %c0_i32_14 : i32
    scf.if %19 {
      %c0_15 = arith.constant 0 : index
      %c0_16 = arith.constant 0 : index
      %20 = vector.load %arg10[%c0_15, %c0_16] : memref<8x128xf32, #tpu.memory_space<vmem>>, vector<8x128xf32>
      %cst_17 = arith.constant 3.906250e-03 : f32
      %21 = vector.broadcast %cst_17 : f32 to vector<8x128xf32>
      %22 = arith.mulf %20, %21 : vector<8x128xf32>
      %23 = arith.truncf %22 : vector<8x128xf32> to vector<8x128xbf16>
      %c0_18 = arith.constant 0 : index
      %c0_19 = arith.constant 0 : index
      %24 = vector.load %arg5[%c0_18, %c0_19] : memref<128x128xbf16, #tpu.memory_space<vmem>>, vector<128x128xbf16>
      %cst_20 = arith.constant dense<0.000000e+00> : vector<8x128xf32>
      %25 = tpu.matmul %23, %24, %cst_20 {dimension_numbers = #tpu.dot_dimension_numbers<[1], [0], [0], [1], [0, 0, 1, 1], [], []>} : vector<8x128xbf16>, vector<128x128xbf16>, vector<8x128xf32> -> vector<8x128xf32>
      %c0_21 = arith.constant 0 : index
      %c0_22 = arith.constant 0 : index
      %26 = vector.load %arg6[%c0_21, %c0_22] : memref<1x128xf32, #tpu.memory_space<vmem>>, vector<1x128xf32>
      %27 = vector.broadcast %26 : vector<1x128xf32> to vector<8x128xf32>
      %28 = arith.addf %25, %27 : vector<8x128xf32>
      %cst_23 = arith.constant 0.000000e+00 : f32
      %29 = vector.broadcast %cst_23 : f32 to vector<8x128xf32>
      %30 = arith.maximumf %28, %29 : vector<8x128xf32>
      %31 = arith.truncf %30 : vector<8x128xf32> to vector<8x128xbf16>
      %c0_24 = arith.constant 0 : index
      %c0_25 = arith.constant 0 : index
      %32 = vector.load %arg7[%c0_24, %c0_25] : memref<128x128xbf16, #tpu.memory_space<vmem>>, vector<128x128xbf16>
      %cst_26 = arith.constant dense<0.000000e+00> : vector<8x128xf32>
      %33 = tpu.matmul %31, %32, %cst_26 {dimension_numbers = #tpu.dot_dimension_numbers<[1], [0], [0], [1], [0, 0, 1, 1], [], []>} : vector<8x128xbf16>, vector<128x128xbf16>, vector<8x128xf32> -> vector<8x128xf32>
      %c0_27 = arith.constant 0 : index
      %c0_28 = arith.constant 0 : index
      %34 = vector.load %arg8[%c0_27, %c0_28] : memref<1x128xf32, #tpu.memory_space<vmem>>, vector<1x128xf32>
      %35 = vector.broadcast %34 : vector<1x128xf32> to vector<8x128xf32>
      %36 = arith.addf %33, %35 : vector<8x128xf32>
      %c0_29 = arith.constant 0 : index
      %c0_30 = arith.constant 0 : index
      %37 = vector.load %arg9[%c0_29, %c0_30] : memref<8x128xf32, #tpu.memory_space<vmem>>, vector<8x128xf32>
      tpu.vector_store %arg9[%c0_29, %c0_30], %36 {strides = array<i32>} : memref<8x128xf32, #tpu.memory_space<vmem>>, vector<8x128xf32>,
    } else {
    }
    return
  }
  func.func @transform_0(%arg0: i32, %arg1: i32) -> (i32, i32, i32) {
    %c0_i32 = arith.constant 0 : i32
    %c0_i32_0 = arith.constant 0 : i32
    return %arg0, %arg1, %c0_i32 : i32, i32, i32
  }
  func.func @transform_1(%arg0: i32, %arg1: i32) -> (i32, i32) {
    %c0_i32 = arith.constant 0 : i32
    %c0_i32_0 = arith.constant 0 : i32
    %c0_i32_1 = arith.constant 0 : i32
    return %c0_i32, %c0_i32_0 : i32, i32
  }
  func.func @transform_2(%arg0: i32, %arg1: i32) -> (i32, i32) {
    %c0_i32 = arith.constant 0 : i32
    %c0_i32_0 = arith.constant 0 : i32
    %c0_i32_1 = arith.constant 0 : i32
    return %c0_i32, %c0_i32_0 : i32, i32
  }
  func.func @transform_3(%arg0: i32, %arg1: i32) -> (i32, i32) {
    %c0_i32 = arith.constant 0 : i32
    %c0_i32_0 = arith.constant 0 : i32
    %c0_i32_1 = arith.constant 0 : i32
    return %c0_i32, %c0_i32_0 : i32, i32
  }
  func.func @transform_4(%arg0: i32, %arg1: i32) -> (i32, i32) {
    %c0_i32 = arith.constant 0 : i32
    %c0_i32_0 = arith.constant 0 : i32
    %c0_i32_1 = arith.constant 0 : i32
    return %c0_i32, %c0_i32_0 : i32, i32
  }
  func.func @transform_5(%arg0: i32, %arg1: i32) -> (i32, i32) {
    %c0_i32 = arith.constant 0 : i32
    %c0_i32_0 = arith.constant 0 : i32
    %c0_i32_1 = arith.constant 0 : i32
    return %c0_i32, %c0_i32_0 : i32, i32
  }
  func.func @transform_6(%arg0: i32, %arg1: i32) -> (i32, i32) {
    %c0_i32 = arith.constant 0 : i32
    %c0_i32_0 = arith.constant 0 : i32
    %c0_i32_1 = arith.constant 0 : i32
    return %c0_i32, %c0_i32_0 : i32, i32
  }
  func.func @transform_7(%arg0: i32, %arg1: i32) -> (i32, i32) {
    %c0_i32 = arith.constant 0 : i32
    %c0_i32_0 = arith.constant 0 : i32
    return %arg0, %c0_i32 : i32, i32
  }
}

</mosaic_0001>

<llo_original>
// kernel: tpu_custom_call.1
$region0: #{tpu_custom_call.1}
  #allocation0 [shape = 'u32[]', space=smem, size = 0x4, offset = 0x4, fixed_abs, tag = 'smem constant byte address 0x4 - core index']
  #allocation1 [shape = 'u32[144,128]{1,0:T(1,128)}', space=vmem, size = 0x12000, scoped, tag = 'internal scratch']
  #allocation2 [shape = 'f32[8,128]{1,0:T(8,128)}', space=vmem, size = 0x1000, scoped, tag = 'scratch operand']
  %s0 = inlined_call_operand.hbm [shape: bf16[8,256,128], index: 0, kind: input, shape index: {}]
  %s1 = inlined_call_operand.hbm [shape: bf16[128,128], index: 1, kind: input, shape index: {}]
  %s2 = inlined_call_operand.vmem [shape: f32[1,128], index: 2, kind: input, shape index: {}]
  %s3 = inlined_call_operand.hbm [shape: bf16[128,128], index: 3, kind: input, shape index: {}]
  %s4 = inlined_call_operand.vmem [shape: f32[1,128], index: 4, kind: input, shape index: {}]
  %s5 = inlined_call_operand.hbm [shape: bf16[128,128], index: 5, kind: input, shape index: {}]
  %s6 = inlined_call_operand.vmem [shape: f32[1,128], index: 6, kind: input, shape index: {}]
  %s7 = inlined_call_operand.hbm [shape: f32[8,128], index: 7, kind: output, shape index: {}]
  %s8 = sld [smem:[#allocation0]]
  $region62: #{tpu_custom_call.1} parent=0
    _
  %s10 = ssub.s32 1, %s8
  %s11 = scalar_select 0, %s10, %s8
  $region1: #{tpu_custom_call.1} parent=0
    #allocation3 [shape = 'u8[524288]{0}', space=vmem, size = 0x80000, scoped, tag = 'input window, operand 0, single buffered']
    #allocation4 [shape = 's32[1]{0}', space=sflag, size = 0x4, scoped, tag = 'scoped memory for tpu_custom_call.1']
    #allocation5 [shape = 's32[1]{0}', space=sflag, size = 0x4, scoped, tag = 'scoped memory for tpu_custom_call.1']
    #allocation6 [shape = 'u8[32768]{0}', space=vmem, size = 0x8000, scoped, tag = 'input window, operand 1, single buffered']
    #allocation7 [shape = 's32[1]{0}', space=sflag, size = 0x4, scoped, tag = 'scoped memory for tpu_custom_call.1']
    #allocation8 [shape = 'u8[32768]{0}', space=vmem, size = 0x8000, scoped, tag = 'input window, operand 3, single buffered']
    #allocation9 [shape = 'u8[32768]{0}', space=vmem, size = 0x8000, scoped, tag = 'input window, operand 5, single buffered']
    #allocation10 [shape = 's32[1]{0}', space=sflag, size = 0x4, scoped, tag = 'scoped memory for tpu_custom_call.1']
    #allocation11 [shape = 'u8[4096]{0}', space=vmem, size = 0x1000, scoped, tag = 'output window, operand 0, single buffered']
    %12 = vsyncpa [#allocation4], 0
    %13 = vsyncpa [#allocation7], 0
    %14 = vsyncpa [#allocation10], 0
    %15 = vsyncpa [#allocation5], 0
    // Predicated region
    $region2: #{tpu_custom_call.1} parent=1 // pred_check
      _
    $region3: #{tpu_custom_call.1} parent=1 // pred_check_branch
      %17 = sbr.rel (0) target = $region5
    $region4: #{tpu_custom_call.1} parent=1 // pred_region
      %s19 = ssub.s32 16384, 16384
      %20 = vsyncadd [#allocation4], %s19
      %s21 = sshll.u32 [#allocation3], 4
      %s22 = int_to_ptr.vmem [resolvable:$true] %s21
      %27 = dma.hbm_to_vmem [thread:$0]  %s0, 16384, %s22, [#allocation4], 64, 64, 4
    $region5: #{tpu_custom_call.1} parent=1 // pred_fallthru
      _
    // Predicated region
    $region6: #{tpu_custom_call.1} parent=1 // pred_check
      _
    $region7: #{tpu_custom_call.1} parent=1 // pred_check_branch
      %29 = sbr.rel (0) target = $region9
    $region8: #{tpu_custom_call.1} parent=1 // pred_region
      %s31 = ssub.s32 1024, 1024
      %32 = vsyncadd [#allocation7], %s31
      %s33 = sshll.u32 [#allocation6], 4
      %s34 = int_to_ptr.vmem [resolvable:$true] %s33
      %39 = dma.hbm_to_vmem [thread:$0]  %s1, 1024, %s34, [#allocation7], 64, 64, 4
    $region9: #{tpu_custom_call.1} parent=1 // pred_fallthru
      _
    // Predicated region
    $region10: #{tpu_custom_call.1} parent=1 // pred_check
      _
    $region11: #{tpu_custom_call.1} parent=1 // pred_check_branch
      %41 = sbr.rel (0) target = $region13
    $region12: #{tpu_custom_call.1} parent=1 // pred_region
      _
    $region13: #{tpu_custom_call.1} parent=1 // pred_fallthru
      _
    // Predicated region
    $region14: #{tpu_custom_call.1} parent=1 // pred_check
      _
    $region15: #{tpu_custom_call.1} parent=1 // pred_check_branch
      %43 = sbr.rel (0) target = $region17
    $region16: #{tpu_custom_call.1} parent=1 // pred_region
      %s45 = ssub.s32 1024, 1024
      %46 = vsyncadd [#allocation7], %s45
      %s47 = sshll.u32 [#allocation8], 4
      %s48 = int_to_ptr.vmem [resolvable:$true] %s47
      %53 = dma.hbm_to_vmem [thread:$0]  %s3, 1024, %s48, [#allocation7], 64, 64, 4
    $region17: #{tpu_custom_call.1} parent=1 // pred_fallthru
      _
    // Predicated region
    $region18: #{tpu_custom_call.1} parent=1 // pred_check
      _
    $region19: #{tpu_custom_call.1} parent=1 // pred_check_branch
      %55 = sbr.rel (0) target = $region21
    $region20: #{tpu_custom_call.1} parent=1 // pred_region
      _
    $region21: #{tpu_custom_call.1} parent=1 // pred_fallthru
      _
    // Predicated region
    $region22: #{tpu_custom_call.1} parent=1 // pred_check
      _
    $region23: #{tpu_custom_call.1} parent=1 // pred_check_branch
      %57 = sbr.rel (0) target = $region25
    $region24: #{tpu_custom_call.1} parent=1 // pred_region
      %s59 = ssub.s32 1024, 1024
      %60 = vsyncadd [#allocation10], %s59
      %s61 = sshll.u32 [#allocation9], 4
      %s62 = int_to_ptr.vmem [resolvable:$true] %s61
      %67 = dma.hbm_to_vmem [thread:$0]  %s5, 1024, %s62, [#allocation10], 64, 64, 4
    $region25: #{tpu_custom_call.1} parent=1 // pred_fallthru
      _
    // Predicated region
    $region26: #{tpu_custom_call.1} parent=1 // pred_check
      _
    $region27: #{tpu_custom_call.1} parent=1 // pred_check_branch
      %69 = sbr.rel (0) target = $region29
    $region28: #{tpu_custom_call.1} parent=1 // pred_region
      _
    $region29: #{tpu_custom_call.1} parent=1 // pred_fallthru
      _
    // Predicated region
    $region30: #{tpu_custom_call.1} parent=1 // pred_check
      _
    $region31: #{tpu_custom_call.1} parent=1 // pred_check_branch
      %71 = sbr.rel (0) target = $region33
    $region32: #{tpu_custom_call.1} parent=1 // pred_region
      %72 = dma.done [#allocation4], 16384
    $region33: #{tpu_custom_call.1} parent=1 // pred_fallthru
      _
    // Predicated region
    $region34: #{tpu_custom_call.1} parent=1 // pred_check
      _
    $region35: #{tpu_custom_call.1} parent=1 // pred_check_branch
      %74 = sbr.rel (0) target = $region37
    $region36: #{tpu_custom_call.1} parent=1 // pred_region
      %75 = dma.done [#allocation7], 1024
    $region37: #{tpu_custom_call.1} parent=1 // pred_fallthru
      _
    // Predicated region
    $region38: #{tpu_custom_call.1} parent=1 // pred_check
      _
    $region39: #{tpu_custom_call.1} parent=1 // pred_check_branch
      %77 = sbr.rel (0) target = $region41
    $region40: #{tpu_custom_call.1} parent=1 // pred_region
      %78 = dma.done [#allocation7], 1024
    $region41: #{tpu_custom_call.1} parent=1 // pred_fallthru
      _
    // Predicated region
    $region42: #{tpu_custom_call.1} parent=1 // pred_check
      _
    $region43: #{tpu_custom_call.1} parent=1 // pred_check_branch
      %80 = sbr.rel (0) target = $region45
    $region44: #{tpu_custom_call.1} parent=1 // pred_region
      %81 = dma.done [#allocation10], 1024
    $region45: #{tpu_custom_call.1} parent=1 // pred_fallthru
      _
    %p83 = scmp.eq.s32.totalorder 0, 0
    // Predicated region
    $region46: #{tpu_custom_call.1} parent=1 // pred_check
      %p84 = pneg %p83
    $region47: #{tpu_custom_call.1} parent=1 // pred_check_branch
      %86 = sbr.rel (%p84) target = $region49
    $region48: #{tpu_custom_call.1} parent=1 // pred_region
      %87 = vst [vmem:[#allocation2] sm:$0xff] 0.0
    $region49: #{tpu_custom_call.1} parent=1 // pred_fallthru
      _
    %v88 = vld [vmem:[#allocation3] sm:$0xf]
    %v89 = vld [vmem:[#allocation3 + $0x4] sm:$0xf]
    %v90 = vld [vmem:[#allocation3 + $0x8] sm:$0xf]
    %v91 = vld [vmem:[#allocation3 + $0xc] sm:$0xf]
    %v92 = vld [vmem:[#allocation3 + $0x10] sm:$0xf]
    %v93 = vld [vmem:[#allocation3 + $0x14] sm:$0xf]
    %v94 = vld [vmem:[#allocation3 + $0x18] sm:$0xf]
    %v95 = vld [vmem:[#allocation3 + $0x1c] sm:$0xf]
    %v96 = vld [vmem:[#allocation3 + $0x20] sm:$0xf]
    %v97 = vld [vmem:[#allocation3 + $0x24] sm:$0xf]
    %v98 = vld [vmem:[#allocation3 + $0x28] sm:$0xf]
    %v99 = vld [vmem:[#allocation3 + $0x2c] sm:$0xf]
    %v100 = vld [vmem:[#allocation3 + $0x30] sm:$0xf]
    %v101 = vld [vmem:[#allocation3 + $0x34] sm:$0xf]
    %v102 = vld [vmem:[#allocation3 + $0x38] sm:$0xf]
    %v103 = vld [vmem:[#allocation3 + $0x3c] sm:$0xf]
    %v104 = vld [vmem:[#allocation3 + $0x40] sm:$0xf]
    %v105 = vld [vmem:[#allocation3 + $0x44] sm:$0xf]
    %v106 = vld [vmem:[#allocation3 + $0x48] sm:$0xf]
    %v107 = vld [vmem:[#allocation3 + $0x4c] sm:$0xf]
    %v108 = vld [vmem:[#allocation3 + $0x50] sm:$0xf]
    %v109 = vld [vmem:[#allocation3 + $0x54] sm:$0xf]
    %v110 = vld [vmem:[#allocation3 + $0x58] sm:$0xf]
    %v111 = vld [vmem:[#allocation3 + $0x5c] sm:$0xf]
    %v112 = vld [vmem:[#allocation3 + $0x60] sm:$0xf]
    %v113 = vld [vmem:[#allocation3 + $0x64] sm:$0xf]
    %v114 = vld [vmem:[#allocation3 + $0x68] sm:$0xf]
    %v115 = vld [vmem:[#allocation3 + $0x6c] sm:$0xf]
    %v116 = vld [vmem:[#allocation3 + $0x70] sm:$0xf]
    %v117 = vld [vmem:[#allocation3 + $0x74] sm:$0xf]
    %v118 = vld [vmem:[#allocation3 + $0x78] sm:$0xf]
    %v119 = vld [vmem:[#allocation3 + $0x7c] sm:$0xf]
    %v120 = vld [vmem:[#allocation3 + $0x80] sm:$0xf]
    %v121 = vld [vmem:[#allocation3 + $0x84] sm:$0xf]
    %v122 = vld [vmem:[#allocation3 + $0x88] sm:$0xf]
    %v123 = vld [vmem:[#allocation3 + $0x8c] sm:$0xf]
    %v124 = vld [vmem:[#allocation3 + $0x90] sm:$0xf]
    %v125 = vld [vmem:[#allocation3 + $0x94] sm:$0xf]
    %v126 = vld [vmem:[#allocation3 + $0x98] sm:$0xf]
    %v127 = vld [vmem:[#allocation3 + $0x9c] sm:$0xf]
    %v128 = vld [vmem:[#allocation3 + $0xa0] sm:$0xf]
    %v129 = vld [vmem:[#allocation3 + $0xa4] sm:$0xf]
    %v130 = vld [vmem:[#allocation3 + $0xa8] sm:$0xf]
    %v131 = vld [vmem:[#allocation3 + $0xac] sm:$0xf]
    %v132 = vld [vmem:[#allocation3 + $0xb0] sm:$0xf]
    %v133 = vld [vmem:[#allocation3 + $0xb4] sm:$0xf]
    %v134 = vld [vmem:[#allocation3 + $0xb8] sm:$0xf]
    %v135 = vld [vmem:[#allocation3 + $0xbc] sm:$0xf]
    %v136 = vld [vmem:[#allocation3 + $0xc0] sm:$0xf]
    %v137 = vld [vmem:[#allocation3 + $0xc4] sm:$0xf]
    %v138 = vld [vmem:[#allocation3 + $0xc8] sm:$0xf]
    %v139 = vld [vmem:[#allocation3 + $0xcc] sm:$0xf]
    %v140 = vld [vmem:[#allocation3 + $0xd0] sm:$0xf]
    %v141 = vld [vmem:[#allocation3 + $0xd4] sm:$0xf]
    %v142 = vld [vmem:[#allocation3 + $0xd8] sm:$0xf]
    %v143 = vld [vmem:[#allocation3 + $0xdc] sm:$0xf]
    %v144 = vld [vmem:[#allocation3 + $0xe0] sm:$0xf]
    %v145 = vld [vmem:[#allocation3 + $0xe4] sm:$0xf]
    %v146 = vld [vmem:[#allocation3 + $0xe8] sm:$0xf]
    %v147 = vld [vmem:[#allocation3 + $0xec] sm:$0xf]
    %v148 = vld [vmem:[#allocation3 + $0xf0] sm:$0xf]
    %v149 = vld [vmem:[#allocation3 + $0xf4] sm:$0xf]
    %v150 = vld [vmem:[#allocation3 + $0xf8] sm:$0xf]
    %v151 = vld [vmem:[#allocation3 + $0xfc] sm:$0xf]
    %v152 = vld [vmem:[#allocation3 + $0x100] sm:$0xf]
    %v153 = vld [vmem:[#allocation3 + $0x104] sm:$0xf]
    %v154 = vld [vmem:[#allocation3 + $0x108] sm:$0xf]
    %v155 = vld [vmem:[#allocation3 + $0x10c] sm:$0xf]
    %v156 = vld [vmem:[#allocation3 + $0x110] sm:$0xf]
    %v157 = vld [vmem:[#allocation3 + $0x114] sm:$0xf]
    %v158 = vld [vmem:[#allocation3 + $0x118] sm:$0xf]
    %v159 = vld [vmem:[#allocation3 + $0x11c] sm:$0xf]
    %v160 = vld [vmem:[#allocation3 + $0x120] sm:$0xf]
    %v161 = vld [vmem:[#allocation3 + $0x124] sm:$0xf]
    %v162 = vld [vmem:[#allocation3 + $0x128] sm:$0xf]
    %v163 = vld [vmem:[#allocation3 + $0x12c] sm:$0xf]
    %v164 = vld [vmem:[#allocation3 + $0x130] sm:$0xf]
    %v165 = vld [vmem:[#allocation3 + $0x134] sm:$0xf]
    %v166 = vld [vmem:[#allocation3 + $0x138] sm:$0xf]
    %v167 = vld [vmem:[#allocation3 + $0x13c] sm:$0xf]
    %v168 = vld [vmem:[#allocation3 + $0x140] sm:$0xf]
    %v169 = vld [vmem:[#allocation3 + $0x144] sm:$0xf]
    %v170 = vld [vmem:[#allocation3 + $0x148] sm:$0xf]
    %v171 = vld [vmem:[#allocation3 + $0x14c] sm:$0xf]
    %v172 = vld [vmem:[#allocation3 + $0x150] sm:$0xf]
    %v173 = vld [vmem:[#allocation3 + $0x154] sm:$0xf]
    %v174 = vld [vmem:[#allocation3 + $0x158] sm:$0xf]
    %v175 = vld [vmem:[#allocation3 + $0x15c] sm:$0xf]
    %v176 = vld [vmem:[#allocation3 + $0x160] sm:$0xf]
    %v177 = vld [vmem:[#allocation3 + $0x164] sm:$0xf]
    %v178 = vld [vmem:[#allocation3 + $0x168] sm:$0xf]
    %v179 = vld [vmem:[#allocation3 + $0x16c] sm:$0xf]
    %v180 = vld [vmem:[#allocation3 + $0x170] sm:$0xf]
    %v181 = vld [vmem:[#allocation3 + $0x174] sm:$0xf]
    %v182 = vld [vmem:[#allocation3 + $0x178] sm:$0xf]
    %v183 = vld [vmem:[#allocation3 + $0x17c] sm:$0xf]
    %v184 = vld [vmem:[#allocation3 + $0x180] sm:$0xf]
    %v185 = vld [vmem:[#allocation3 + $0x184] sm:$0xf]
    %v186 = vld [vmem:[#allocation3 + $0x188] sm:$0xf]
    %v187 = vld [vmem:[#allocation3 + $0x18c] sm:$0xf]
    %v188 = vld [vmem:[#allocation3 + $0x190] sm:$0xf]
    %v189 = vld [vmem:[#allocation3 + $0x194] sm:$0xf]
    %v190 = vld [vmem:[#allocation3 + $0x198] sm:$0xf]
    %v191 = vld [vmem:[#allocation3 + $0x19c] sm:$0xf]
    %v192 = vld [vmem:[#allocation3 + $0x1a0] sm:$0xf]
    %v193 = vld [vmem:[#allocation3 + $0x1a4] sm:$0xf]
    %v194 = vld [vmem:[#allocation3 + $0x1a8] sm:$0xf]
    %v195 = vld [vmem:[#allocation3 + $0x1ac] sm:$0xf]
    %v196 = vld [vmem:[#allocation3 + $0x1b0] sm:$0xf]
    %v197 = vld [vmem:[#allocation3 + $0x1b4] sm:$0xf]
    %v198 = vld [vmem:[#allocation3 + $0x1b8] sm:$0xf]
    %v199 = vld [vmem:[#allocation3 + $0x1bc] sm:$0xf]
    %v200 = vld [vmem:[#allocation3 + $0x1c0] sm:$0xf]
    %v201 = vld [vmem:[#allocation3 + $0x1c4] sm:$0xf]
    %v202 = vld [vmem:[#allocation3 + $0x1c8] sm:$0xf]
    %v203 = vld [vmem:[#allocation3 + $0x1cc] sm:$0xf]
    %v204 = vld [vmem:[#allocation3 + $0x1d0] sm:$0xf]
    %v205 = vld [vmem:[#allocation3 + $0x1d4] sm:$0xf]
    %v206 = vld [vmem:[#allocation3 + $0x1d8] sm:$0xf]
    %v207 = vld [vmem:[#allocation3 + $0x1dc] sm:$0xf]
    %v208 = vld [vmem:[#allocation3 + $0x1e0] sm:$0xf]
    %v209 = vld [vmem:[#allocation3 + $0x1e4] sm:$0xf]
    %v210 = vld [vmem:[#allocation3 + $0x1e8] sm:$0xf]
    %v211 = vld [vmem:[#allocation3 + $0x1ec] sm:$0xf]
    %v212 = vld [vmem:[#allocation3 + $0x1f0] sm:$0xf]
    %v213 = vld [vmem:[#allocation3 + $0x1f4] sm:$0xf]
    %v214 = vld [vmem:[#allocation3 + $0x1f8] sm:$0xf]
    %v215 = vld [vmem:[#allocation3 + $0x1fc] sm:$0xf]
    %v216 = vld [vmem:[#allocation3 + $0x200] sm:$0xf]
    %v217 = vld [vmem:[#allocation3 + $0x204] sm:$0xf]
    %v218 = vld [vmem:[#allocation3 + $0x208] sm:$0xf]
    %v219 = vld [vmem:[#allocation3 + $0x20c] sm:$0xf]
    %v220 = vld [vmem:[#allocation3 + $0x210] sm:$0xf]
    %v221 = vld [vmem:[#allocation3 + $0x214] sm:$0xf]
    %v222 = vld [vmem:[#allocation3 + $0x218] sm:$0xf]
    %v223 = vld [vmem:[#allocation3 + $0x21c] sm:$0xf]
    %v224 = vld [vmem:[#allocation3 + $0x220] sm:$0xf]
    %v225 = vld [vmem:[#allocation3 + $0x224] sm:$0xf]
    %v226 = vld [vmem:[#allocation3 + $0x228] sm:$0xf]
    %v227 = vld [vmem:[#allocation3 + $0x22c] sm:$0xf]
    %v228 = vld [vmem:[#allocation3 + $0x230] sm:$0xf]
    %v229 = vld [vmem:[#allocation3 + $0x234] sm:$0xf]
    %v230 = vld [vmem:[#allocation3 + $0x238] sm:$0xf]
    %v231 = vld [vmem:[#allocation3 + $0x23c] sm:$0xf]
    %v232 = vld [vmem:[#allocation3 + $0x240] sm:$0xf]
    %v233 = vld [vmem:[#allocation3 + $0x244] sm:$0xf]
    %v234 = vld [vmem:[#allocation3 + $0x248] sm:$0xf]
    %v235 = vld [vmem:[#allocation3 + $0x24c] sm:$0xf]
    %v236 = vld [vmem:[#allocation3 + $0x250] sm:$0xf]
    %v237 = vld [vmem:[#allocation3 + $0x254] sm:$0xf]
    %v238 = vld [vmem:[#allocation3 + $0x258] sm:$0xf]
    %v239 = vld [vmem:[#allocation3 + $0x25c] sm:$0xf]
    %v240 = vld [vmem:[#allocation3 + $0x260] sm:$0xf]
    %v241 = vld [vmem:[#allocation3 + $0x264] sm:$0xf]
    %v242 = vld [vmem:[#allocation3 + $0x268] sm:$0xf]
    %v243 = vld [vmem:[#allocation3 + $0x26c] sm:$0xf]
    %v244 = vld [vmem:[#allocation3 + $0x270] sm:$0xf]
    %v245 = vld [vmem:[#allocation3 + $0x274] sm:$0xf]
    %v246 = vld [vmem:[#allocation3 + $0x278] sm:$0xf]
    %v247 = vld [vmem:[#allocation3 + $0x27c] sm:$0xf]
    %v248 = vld [vmem:[#allocation3 + $0x280] sm:$0xf]
    %v249 = vld [vmem:[#allocation3 + $0x284] sm:$0xf]
    %v250 = vld [vmem:[#allocation3 + $0x288] sm:$0xf]
    %v251 = vld [vmem:[#allocation3 + $0x28c] sm:$0xf]
    %v252 = vld [vmem:[#allocation3 + $0x290] sm:$0xf]
    %v253 = vld [vmem:[#allocation3 + $0x294] sm:$0xf]
    %v254 = vld [vmem:[#allocation3 + $0x298] sm:$0xf]
    %v255 = vld [vmem:[#allocation3 + $0x29c] sm:$0xf]
    %v256 = vld [vmem:[#allocation3 + $0x2a0] sm:$0xf]
    %v257 = vld [vmem:[#allocation3 + $0x2a4] sm:$0xf]
    %v258 = vld [vmem:[#allocation3 + $0x2a8] sm:$0xf]
    %v259 = vld [vmem:[#allocation3 + $0x2ac] sm:$0xf]
    %v260 = vld [vmem:[#allocation3 + $0x2b0] sm:$0xf]
    %v261 = vld [vmem:[#allocation3 + $0x2b4] sm:$0xf]
    %v262 = vld [vmem:[#allocation3 + $0x2b8] sm:$0xf]
    %v263 = vld [vmem:[#allocation3 + $0x2bc] sm:$0xf]
    %v264 = vld [vmem:[#allocation3 + $0x2c0] sm:$0xf]
    %v265 = vld [vmem:[#allocation3 + $0x2c4] sm:$0xf]
    %v266 = vld [vmem:[#allocation3 + $0x2c8] sm:$0xf]
    %v267 = vld [vmem:[#allocation3 + $0x2cc] sm:$0xf]
    %v268 = vld [vmem:[#allocation3 + $0x2d0] sm:$0xf]
    %v269 = vld [vmem:[#allocation3 + $0x2d4] sm:$0xf]
    %v270 = vld [vmem:[#allocation3 + $0x2d8] sm:$0xf]
    %v271 = vld [vmem:[#allocation3 + $0x2dc] sm:$0xf]
    %v272 = vld [vmem:[#allocation3 + $0x2e0] sm:$0xf]
    %v273 = vld [vmem:[#allocation3 + $0x2e4] sm:$0xf]
    %v274 = vld [vmem:[#allocation3 + $0x2e8] sm:$0xf]
    %v275 = vld [vmem:[#allocation3 + $0x2ec] sm:$0xf]
    %v276 = vld [vmem:[#allocation3 + $0x2f0] sm:$0xf]
    %v277 = vld [vmem:[#allocation3 + $0x2f4] sm:$0xf]
    %v278 = vld [vmem:[#allocation3 + $0x2f8] sm:$0xf]
    %v279 = vld [vmem:[#allocation3 + $0x2fc] sm:$0xf]
    %v280 = vld [vmem:[#allocation3 + $0x300] sm:$0xf]
    %v281 = vld [vmem:[#allocation3 + $0x304] sm:$0xf]
    %v282 = vld [vmem:[#allocation3 + $0x308] sm:$0xf]
    %v283 = vld [vmem:[#allocation3 + $0x30c] sm:$0xf]
    %v284 = vld [vmem:[#allocation3 + $0x310] sm:$0xf]
    %v285 = vld [vmem:[#allocation3 + $0x314] sm:$0xf]
    %v286 = vld [vmem:[#allocation3 + $0x318] sm:$0xf]
    %v287 = vld [vmem:[#allocation3 + $0x31c] sm:$0xf]
    %v288 = vld [vmem:[#allocation3 + $0x320] sm:$0xf]
    %v289 = vld [vmem:[#allocation3 + $0x324] sm:$0xf]
    %v290 = vld [vmem:[#allocation3 + $0x328] sm:$0xf]
    %v291 = vld [vmem:[#allocation3 + $0x32c] sm:$0xf]
    %v292 = vld [vmem:[#allocation3 + $0x330] sm:$0xf]
    %v293 = vld [vmem:[#allocation3 + $0x334] sm:$0xf]
    %v294 = vld [vmem:[#allocation3 + $0x338] sm:$0xf]
    %v295 = vld [vmem:[#allocation3 + $0x33c] sm:$0xf]
    %v296 = vld [vmem:[#allocation3 + $0x340] sm:$0xf]
    %v297 = vld [vmem:[#allocation3 + $0x344] sm:$0xf]
    %v298 = vld [vmem:[#allocation3 + $0x348] sm:$0xf]
    %v299 = vld [vmem:[#allocation3 + $0x34c] sm:$0xf]
    %v300 = vld [vmem:[#allocation3 + $0x350] sm:$0xf]
    %v301 = vld [vmem:[#allocation3 + $0x354] sm:$0xf]
    %v302 = vld [vmem:[#allocation3 + $0x358] sm:$0xf]
    %v303 = vld [vmem:[#allocation3 + $0x35c] sm:$0xf]
    %v304 = vld [vmem:[#allocation3 + $0x360] sm:$0xf]
    %v305 = vld [vmem:[#allocation3 + $0x364] sm:$0xf]
    %v306 = vld [vmem:[#allocation3 + $0x368] sm:$0xf]
    %v307 = vld [vmem:[#allocation3 + $0x36c] sm:$0xf]
    %v308 = vld [vmem:[#allocation3 + $0x370] sm:$0xf]
    %v309 = vld [vmem:[#allocation3 + $0x374] sm:$0xf]
    %v310 = vld [vmem:[#allocation3 + $0x378] sm:$0xf]
    %v311 = vld [vmem:[#allocation3 + $0x37c] sm:$0xf]
    %v312 = vld [vmem:[#allocation3 + $0x380] sm:$0xf]
    %v313 = vld [vmem:[#allocation3 + $0x384] sm:$0xf]
    %v314 = vld [vmem:[#allocation3 + $0x388] sm:$0xf]
    %v315 = vld [vmem:[#allocation3 + $0x38c] sm:$0xf]
    %v316 = vld [vmem:[#allocation3 + $0x390] sm:$0xf]
    %v317 = vld [vmem:[#allocation3 + $0x394] sm:$0xf]
    %v318 = vld [vmem:[#allocation3 + $0x398] sm:$0xf]
    %v319 = vld [vmem:[#allocation3 + $0x39c] sm:$0xf]
    %v320 = vld [vmem:[#allocation3 + $0x3a0] sm:$0xf]
    %v321 = vld [vmem:[#allocation3 + $0x3a4] sm:$0xf]
    %v322 = vld [vmem:[#allocation3 + $0x3a8] sm:$0xf]
    %v323 = vld [vmem:[#allocation3 + $0x3ac] sm:$0xf]
    %v324 = vld [vmem:[#allocation3 + $0x3b0] sm:$0xf]
    %v325 = vld [vmem:[#allocation3 + $0x3b4] sm:$0xf]
    %v326 = vld [vmem:[#allocation3 + $0x3b8] sm:$0xf]
    %v327 = vld [vmem:[#allocation3 + $0x3bc] sm:$0xf]
    %v328 = vld [vmem:[#allocation3 + $0x3c0] sm:$0xf]
    %v329 = vld [vmem:[#allocation3 + $0x3c4] sm:$0xf]
    %v330 = vld [vmem:[#allocation3 + $0x3c8] sm:$0xf]
    %v331 = vld [vmem:[#allocation3 + $0x3cc] sm:$0xf]
    %v332 = vld [vmem:[#allocation3 + $0x3d0] sm:$0xf]
    %v333 = vld [vmem:[#allocation3 + $0x3d4] sm:$0xf]
    %v334 = vld [vmem:[#allocation3 + $0x3d8] sm:$0xf]
    %v335 = vld [vmem:[#allocation3 + $0x3dc] sm:$0xf]
    %v336 = vld [vmem:[#allocation3 + $0x3e0] sm:$0xf]
    %v337 = vld [vmem:[#allocation3 + $0x3e4] sm:$0xf]
    %v338 = vld [vmem:[#allocation3 + $0x3e8] sm:$0xf]
    %v339 = vld [vmem:[#allocation3 + $0x3ec] sm:$0xf]
    %v340 = vld [vmem:[#allocation3 + $0x3f0] sm:$0xf]
    %v341 = vld [vmem:[#allocation3 + $0x3f4] sm:$0xf]
    %v342 = vld [vmem:[#allocation3 + $0x3f8] sm:$0xf]
    %v343 = vld [vmem:[#allocation3 + $0x3fc] sm:$0xf]
    %v344 = vld [vmem:[#allocation6] sm:$0xf]
    %v345 = vld [vmem:[#allocation6 + $0x4] sm:$0xf]
    %v346 = vld [vmem:[#allocation6 + $0x8] sm:$0xf]
    %v347 = vld [vmem:[#allocation6 + $0xc] sm:$0xf]
    %v348 = vld [vmem:[#allocation6 + $0x10] sm:$0xf]
    %v349 = vld [vmem:[#allocation6 + $0x14] sm:$0xf]
    %v350 = vld [vmem:[#allocation6 + $0x18] sm:$0xf]
    %v351 = vld [vmem:[#allocation6 + $0x1c] sm:$0xf]
    %v352 = vld [vmem:[#allocation6 + $0x20] sm:$0xf]
    %v353 = vld [vmem:[#allocation6 + $0x24] sm:$0xf]
    %v354 = vld [vmem:[#allocation6 + $0x28] sm:$0xf]
    %v355 = vld [vmem:[#allocation6 + $0x2c] sm:$0xf]
    %v356 = vld [vmem:[#allocation6 + $0x30] sm:$0xf]
    %v357 = vld [vmem:[#allocation6 + $0x34] sm:$0xf]
    %v358 = vld [vmem:[#allocation6 + $0x38] sm:$0xf]
    %v359 = vld [vmem:[#allocation6 + $0x3c] sm:$0xf]
    %v360 = vld [vmem:[%s2] sm:$0x1]
    %v362 = vlaneseq
    %v363 = vshrl.u32 %v362, 7
    %v364 = vsub.s32 0, %v363
    %v365 = vrot.slane %v360, %v364
    %v623 = vunpack.c.l.b16 %v88
    %v624 = vunpack.c.l.b16 %v89
    %v625 = vunpack.c.l.b16 %v90
    %v626 = vunpack.c.l.b16 %v91
    %v627 = vunpack.c.l.b16 %v92
    %v628 = vunpack.c.l.b16 %v93
    %v629 = vunpack.c.l.b16 %v94
    %v630 = vunpack.c.l.b16 %v95
    %v631 = vunpack.c.l.b16 %v96
    %v632 = vunpack.c.l.b16 %v97
    %v633 = vunpack.c.l.b16 %v98
    %v634 = vunpack.c.l.b16 %v99
    %v635 = vunpack.c.l.b16 %v100
    %v636 = vunpack.c.l.b16 %v101
    %v637 = vunpack.c.l.b16 %v102
    %v638 = vunpack.c.l.b16 %v103
    %v639 = vunpack.c.l.b16 %v104
    %v640 = vunpack.c.l.b16 %v105
    %v641 = vunpack.c.l.b16 %v106
    %v642 = vunpack.c.l.b16 %v107
    %v643 = vunpack.c.l.b16 %v108
    %v644 = vunpack.c.l.b16 %v109
    %v645 = vunpack.c.l.b16 %v110
    %v646 = vunpack.c.l.b16 %v111
    %v647 = vunpack.c.l.b16 %v112
    %v648 = vunpack.c.l.b16 %v113
    %v649 = vunpack.c.l.b16 %v114
    %v650 = vunpack.c.l.b16 %v115
    %v651 = vunpack.c.l.b16 %v116
    %v652 = vunpack.c.l.b16 %v117
    %v653 = vunpack.c.l.b16 %v118
    %v654 = vunpack.c.l.b16 %v119
    %v655 = vunpack.c.l.b16 %v120
    %v656 = vunpack.c.l.b16 %v121
    %v657 = vunpack.c.l.b16 %v122
    %v658 = vunpack.c.l.b16 %v123
    %v659 = vunpack.c.l.b16 %v124
    %v660 = vunpack.c.l.b16 %v125
    %v661 = vunpack.c.l.b16 %v126
    %v662 = vunpack.c.l.b16 %v127
    %v663 = vunpack.c.l.b16 %v128
    %v664 = vunpack.c.l.b16 %v129
    %v665 = vunpack.c.l.b16 %v130
    %v666 = vunpack.c.l.b16 %v131
    %v667 = vunpack.c.l.b16 %v132
    %v668 = vunpack.c.l.b16 %v133
    %v669 = vunpack.c.l.b16 %v134
    %v670 = vunpack.c.l.b16 %v135
    %v671 = vunpack.c.l.b16 %v136
    %v672 = vunpack.c.l.b16 %v137
    %v673 = vunpack.c.l.b16 %v138
    %v674 = vunpack.c.l.b16 %v139
    %v675 = vunpack.c.l.b16 %v140
    %v676 = vunpack.c.l.b16 %v141
    %v677 = vunpack.c.l.b16 %v142
    %v678 = vunpack.c.l.b16 %v143
    %v679 = vunpack.c.l.b16 %v144
    %v680 = vunpack.c.l.b16 %v145
    %v681 = vunpack.c.l.b16 %v146
    %v682 = vunpack.c.l.b16 %v147
    %v683 = vunpack.c.l.b16 %v148
    %v684 = vunpack.c.l.b16 %v149
    %v685 = vunpack.c.l.b16 %v150
    %v686 = vunpack.c.l.b16 %v151
    %v687 = vunpack.c.l.b16 %v152
    %v688 = vunpack.c.l.b16 %v153
    %v689 = vunpack.c.l.b16 %v154
    %v690 = vunpack.c.l.b16 %v155
    %v691 = vunpack.c.l.b16 %v156
    %v692 = vunpack.c.l.b16 %v157
    %v693 = vunpack.c.l.b16 %v158
    %v694 = vunpack.c.l.b16 %v159
    %v695 = vunpack.c.l.b16 %v160
    %v696 = vunpack.c.l.b16 %v161
    %v697 = vunpack.c.l.b16 %v162
    %v698 = vunpack.c.l.b16 %v163
    %v699 = vunpack.c.l.b16 %v164
    %v700 = vunpack.c.l.b16 %v165
    %v701 = vunpack.c.l.b16 %v166
    %v702 = vunpack.c.l.b16 %v167
    %v703 = vunpack.c.l.b16 %v168
    %v704 = vunpack.c.l.b16 %v169
    %v705 = vunpack.c.l.b16 %v170
    %v706 = vunpack.c.l.b16 %v171
    %v707 = vunpack.c.l.b16 %v172
    %v708 = vunpack.c.l.b16 %v173
    %v709 = vunpack.c.l.b16 %v174
    %v710 = vunpack.c.l.b16 %v175
    %v711 = vunpack.c.l.b16 %v176
    %v712 = vunpack.c.l.b16 %v177
    %v713 = vunpack.c.l.b16 %v178
    %v714 = vunpack.c.l.b16 %v179
    %v715 = vunpack.c.l.b16 %v180
    %v716 = vunpack.c.l.b16 %v181
    %v717 = vunpack.c.l.b16 %v182
    %v718 = vunpack.c.l.b16 %v183
    %v719 = vunpack.c.l.b16 %v184
    %v720 = vunpack.c.l.b16 %v185
    %v721 = vunpack.c.l.b16 %v186
    %v722 = vunpack.c.l.b16 %v187
    %v723 = vunpack.c.l.b16 %v188
    %v724 = vunpack.c.l.b16 %v189
    %v725 = vunpack.c.l.b16 %v190
    %v726 = vunpack.c.l.b16 %v191
    %v727 = vunpack.c.l.b16 %v192
    %v728 = vunpack.c.l.b16 %v193
    %v729 = vunpack.c.l.b16 %v194
    %v730 = vunpack.c.l.b16 %v195
    %v731 = vunpack.c.l.b16 %v196
    %v732 = vunpack.c.l.b16 %v197
    %v733 = vunpack.c.l.b16 %v198
    %v734 = vunpack.c.l.b16 %v199
    %v735 = vunpack.c.l.b16 %v200
    %v736 = vunpack.c.l.b16 %v201
    %v737 = vunpack.c.l.b16 %v202
    %v738 = vunpack.c.l.b16 %v203
    %v739 = vunpack.c.l.b16 %v204
    %v740 = vunpack.c.l.b16 %v205
    %v741 = vunpack.c.l.b16 %v206
    %v742 = vunpack.c.l.b16 %v207
    %v743 = vunpack.c.l.b16 %v208
    %v744 = vunpack.c.l.b16 %v209
    %v745 = vunpack.c.l.b16 %v210
    %v746 = vunpack.c.l.b16 %v211
    %v747 = vunpack.c.l.b16 %v212
    %v748 = vunpack.c.l.b16 %v213
    %v749 = vunpack.c.l.b16 %v214
    %v750 = vunpack.c.l.b16 %v215
    %v751 = vunpack.c.l.b16 %v216
    %v752 = vunpack.c.l.b16 %v217
    %v753 = vunpack.c.l.b16 %v218
    %v754 = vunpack.c.l.b16 %v219
    %v755 = vunpack.c.l.b16 %v220
    %v756 = vunpack.c.l.b16 %v221
    %v757 = vunpack.c.l.b16 %v222
    %v758 = vunpack.c.l.b16 %v223
    %v759 = vunpack.c.l.b16 %v224
    %v760 = vunpack.c.l.b16 %v225
    %v761 = vunpack.c.l.b16 %v226
    %v762 = vunpack.c.l.b16 %v227
    %v763 = vunpack.c.l.b16 %v228
    %v764 = vunpack.c.l.b16 %v229
    %v765 = vunpack.c.l.b16 %v230
    %v766 = vunpack.c.l.b16 %v231
    %v767 = vunpack.c.l.b16 %v232
    %v768 = vunpack.c.l.b16 %v233
    %v769 = vunpack.c.l.b16 %v234
    %v770 = vunpack.c.l.b16 %v235
    %v771 = vunpack.c.l.b16 %v236
    %v772 = vunpack.c.l.b16 %v237
    %v773 = vunpack.c.l.b16 %v238
    %v774 = vunpack.c.l.b16 %v239
    %v775 = vunpack.c.l.b16 %v240
    %v776 = vunpack.c.l.b16 %v241
    %v777 = vunpack.c.l.b16 %v242
    %v778 = vunpack.c.l.b16 %v243
    %v779 = vunpack.c.l.b16 %v244
    %v780 = vunpack.c.l.b16 %v245
    %v781 = vunpack.c.l.b16 %v246
    %v782 = vunpack.c.l.b16 %v247
    %v783 = vunpack.c.l.b16 %v248
    %v784 = vunpack.c.l.b16 %v249
    %v785 = vunpack.c.l.b16 %v250
    %v786 = vunpack.c.l.b16 %v251
    %v787 = vunpack.c.l.b16 %v252
    %v788 = vunpack.c.l.b16 %v253
    %v789 = vunpack.c.l.b16 %v254
    %v790 = vunpack.c.l.b16 %v255
    %v791 = vunpack.c.l.b16 %v256
    %v792 = vunpack.c.l.b16 %v257
    %v793 = vunpack.c.l.b16 %v258
    %v794 = vunpack.c.l.b16 %v259
    %v795 = vunpack.c.l.b16 %v260
    %v796 = vunpack.c.l.b16 %v261
    %v797 = vunpack.c.l.b16 %v262
    %v798 = vunpack.c.l.b16 %v263
    %v799 = vunpack.c.l.b16 %v264
    %v800 = vunpack.c.l.b16 %v265
    %v801 = vunpack.c.l.b16 %v266
    %v802 = vunpack.c.l.b16 %v267
    %v803 = vunpack.c.l.b16 %v268
    %v804 = vunpack.c.l.b16 %v269
    %v805 = vunpack.c.l.b16 %v270
    %v806 = vunpack.c.l.b16 %v271
    %v807 = vunpack.c.l.b16 %v272
    %v808 = vunpack.c.l.b16 %v273
    %v809 = vunpack.c.l.b16 %v274
    %v810 = vunpack.c.l.b16 %v275
    %v811 = vunpack.c.l.b16 %v276
    %v812 = vunpack.c.l.b16 %v277
    %v813 = vunpack.c.l.b16 %v278
    %v814 = vunpack.c.l.b16 %v279
    %v815 = vunpack.c.l.b16 %v280
    %v816 = vunpack.c.l.b16 %v281
    %v817 = vunpack.c.l.b16 %v282
    %v818 = vunpack.c.l.b16 %v283
    %v819 = vunpack.c.l.b16 %v284
    %v820 = vunpack.c.l.b16 %v285
    %v821 = vunpack.c.l.b16 %v286
    %v822 = vunpack.c.l.b16 %v287
    %v823 = vunpack.c.l.b16 %v288
    %v824 = vunpack.c.l.b16 %v289
    %v825 = vunpack.c.l.b16 %v290
    %v826 = vunpack.c.l.b16 %v291
    %v827 = vunpack.c.l.b16 %v292
    %v828 = vunpack.c.l.b16 %v293
    %v829 = vunpack.c.l.b16 %v294
    %v830 = vunpack.c.l.b16 %v295
    %v831 = vunpack.c.l.b16 %v296
    %v832 = vunpack.c.l.b16 %v297
    %v833 = vunpack.c.l.b16 %v298
    %v834 = vunpack.c.l.b16 %v299
    %v835 = vunpack.c.l.b16 %v300
    %v836 = vunpack.c.l.b16 %v301
    %v837 = vunpack.c.l.b16 %v302
    %v838 = vunpack.c.l.b16 %v303
    %v839 = vunpack.c.l.b16 %v304
    %v840 = vunpack.c.l.b16 %v305
    %v841 = vunpack.c.l.b16 %v306
    %v842 = vunpack.c.l.b16 %v307
    %v843 = vunpack.c.l.b16 %v308
    %v844 = vunpack.c.l.b16 %v309
    %v845 = vunpack.c.l.b16 %v310
    %v846 = vunpack.c.l.b16 %v311
    %v847 = vunpack.c.l.b16 %v312
    %v848 = vunpack.c.l.b16 %v313
    %v849 = vunpack.c.l.b16 %v314
    %v850 = vunpack.c.l.b16 %v315
    %v851 = vunpack.c.l.b16 %v316
    %v852 = vunpack.c.l.b16 %v317
    %v853 = vunpack.c.l.b16 %v318
    %v854 = vunpack.c.l.b16 %v319
    %v855 = vunpack.c.l.b16 %v320
    %v856 = vunpack.c.l.b16 %v321
    %v857 = vunpack.c.l.b16 %v322
    %v858 = vunpack.c.l.b16 %v323
    %v859 = vunpack.c.l.b16 %v324
    %v860 = vunpack.c.l.b16 %v325
    %v861 = vunpack.c.l.b16 %v326
    %v862 = vunpack.c.l.b16 %v327
    %v863 = vunpack.c.l.b16 %v328
    %v864 = vunpack.c.l.b16 %v329
    %v865 = vunpack.c.l.b16 %v330
    %v866 = vunpack.c.l.b16 %v331
    %v867 = vunpack.c.l.b16 %v332
    %v868 = vunpack.c.l.b16 %v333
    %v869 = vunpack.c.l.b16 %v334
    %v870 = vunpack.c.l.b16 %v335
    %v871 = vunpack.c.l.b16 %v336
    %v872 = vunpack.c.l.b16 %v337
    %v873 = vunpack.c.l.b16 %v338
    %v874 = vunpack.c.l.b16 %v339
    %v875 = vunpack.c.l.b16 %v340
    %v876 = vunpack.c.l.b16 %v341
    %v877 = vunpack.c.l.b16 %v342
    %v878 = vunpack.c.l.b16 %v343
    %v879 = vpack.c.b16 %v624, %v623
    %v880 = vpack.c.b16 %v626, %v625
    %v881 = vpack.c.b16 %v628, %v627
    %v882 = vpack.c.b16 %v630, %v629
    %v883 = vpack.c.b16 %v632, %v631
    %v884 = vpack.c.b16 %v634, %v633
    %v885 = vpack.c.b16 %v636, %v635
    %v886 = vpack.c.b16 %v638, %v637
    %v887 = vpack.c.b16 %v640, %v639
    %v888 = vpack.c.b16 %v642, %v641
    %v889 = vpack.c.b16 %v644, %v643
    %v890 = vpack.c.b16 %v646, %v645
    %v891 = vpack.c.b16 %v648, %v647
    %v892 = vpack.c.b16 %v650, %v649
    %v893 = vpack.c.b16 %v652, %v651
    %v894 = vpack.c.b16 %v654, %v653
    %v895 = vpack.c.b16 %v656, %v655
    %v896 = vpack.c.b16 %v658, %v657
    %v897 = vpack.c.b16 %v660, %v659
    %v898 = vpack.c.b16 %v662, %v661
    %v899 = vpack.c.b16 %v664, %v663
    %v900 = vpack.c.b16 %v666, %v665
    %v901 = vpack.c.b16 %v668, %v667
    %v902 = vpack.c.b16 %v670, %v669
    %v903 = vpack.c.b16 %v672, %v671
    %v904 = vpack.c.b16 %v674, %v673
    %v905 = vpack.c.b16 %v676, %v675
    %v906 = vpack.c.b16 %v678, %v677
    %v907 = vpack.c.b16 %v680, %v679
    %v908 = vpack.c.b16 %v682, %v681
    %v909 = vpack.c.b16 %v684, %v683
    %v910 = vpack.c.b16 %v686, %v685
    %v911 = vpack.c.b16 %v688, %v687
    %v912 = vpack.c.b16 %v690, %v689
    %v913 = vpack.c.b16 %v692, %v691
    %v914 = vpack.c.b16 %v694, %v693
    %v915 = vpack.c.b16 %v696, %v695
    %v916 = vpack.c.b16 %v698, %v697
    %v917 = vpack.c.b16 %v700, %v699
    %v918 = vpack.c.b16 %v702, %v701
    %v919 = vpack.c.b16 %v704, %v703
    %v920 = vpack.c.b16 %v706, %v705
    %v921 = vpack.c.b16 %v708, %v707
    %v922 = vpack.c.b16 %v710, %v709
    %v923 = vpack.c.b16 %v712, %v711
    %v924 = vpack.c.b16 %v714, %v713
    %v925 = vpack.c.b16 %v716, %v715
    %v926 = vpack.c.b16 %v718, %v717
    %v927 = vpack.c.b16 %v720, %v719
    %v928 = vpack.c.b16 %v722, %v721
    %v929 = vpack.c.b16 %v724, %v723
    %v930 = vpack.c.b16 %v726, %v725
    %v931 = vpack.c.b16 %v728, %v727
    %v932 = vpack.c.b16 %v730, %v729
    %v933 = vpack.c.b16 %v732, %v731
    %v934 = vpack.c.b16 %v734, %v733
    %v935 = vpack.c.b16 %v736, %v735
    %v936 = vpack.c.b16 %v738, %v737
    %v937 = vpack.c.b16 %v740, %v739
    %v938 = vpack.c.b16 %v742, %v741
    %v939 = vpack.c.b16 %v744, %v743
    %v940 = vpack.c.b16 %v746, %v745
    %v941 = vpack.c.b16 %v748, %v747
    %v942 = vpack.c.b16 %v750, %v749
    %v943 = vpack.c.b16 %v752, %v751
    %v944 = vpack.c.b16 %v754, %v753
    %v945 = vpack.c.b16 %v756, %v755
    %v946 = vpack.c.b16 %v758, %v757
    %v947 = vpack.c.b16 %v760, %v759
    %v948 = vpack.c.b16 %v762, %v761
    %v949 = vpack.c.b16 %v764, %v763
    %v950 = vpack.c.b16 %v766, %v765
    %v951 = vpack.c.b16 %v768, %v767
    %v952 = vpack.c.b16 %v770, %v769
    %v953 = vpack.c.b16 %v772, %v771
    %v954 = vpack.c.b16 %v774, %v773
    %v955 = vpack.c.b16 %v776, %v775
    %v956 = vpack.c.b16 %v778, %v777
    %v957 = vpack.c.b16 %v780, %v779
    %v958 = vpack.c.b16 %v782, %v781
    %v959 = vpack.c.b16 %v784, %v783
    %v960 = vpack.c.b16 %v786, %v785
    %v961 = vpack.c.b16 %v788, %v787
    %v962 = vpack.c.b16 %v790, %v789
    %v963 = vpack.c.b16 %v792, %v791
    %v964 = vpack.c.b16 %v794, %v793
    %v965 = vpack.c.b16 %v796, %v795
    %v966 = vpack.c.b16 %v798, %v797
    %v967 = vpack.c.b16 %v800, %v799
    %v968 = vpack.c.b16 %v802, %v801
    %v969 = vpack.c.b16 %v804, %v803
    %v970 = vpack.c.b16 %v806, %v805
    %v971 = vpack.c.b16 %v808, %v807
    %v972 = vpack.c.b16 %v810, %v809
    %v973 = vpack.c.b16 %v812, %v811
    %v974 = vpack.c.b16 %v814, %v813
    %v975 = vpack.c.b16 %v816, %v815
    %v976 = vpack.c.b16 %v818, %v817
    %v977 = vpack.c.b16 %v820, %v819
    %v978 = vpack.c.b16 %v822, %v821
    %v979 = vpack.c.b16 %v824, %v823
    %v980 = vpack.c.b16 %v826, %v825
    %v981 = vpack.c.b16 %v828, %v827
    %v982 = vpack.c.b16 %v830, %v829
    %v983 = vpack.c.b16 %v832, %v831
    %v984 = vpack.c.b16 %v834, %v833
    %v985 = vpack.c.b16 %v836, %v835
    %v986 = vpack.c.b16 %v838, %v837
    %v987 = vpack.c.b16 %v840, %v839
    %v988 = vpack.c.b16 %v842, %v841
    %v989 = vpack.c.b16 %v844, %v843
    %v990 = vpack.c.b16 %v846, %v845
    %v991 = vpack.c.b16 %v848, %v847
    %v992 = vpack.c.b16 %v850, %v849
    %v993 = vpack.c.b16 %v852, %v851
    %v994 = vpack.c.b16 %v854, %v853
    %v995 = vpack.c.b16 %v856, %v855
    %v996 = vpack.c.b16 %v858, %v857
    %v997 = vpack.c.b16 %v860, %v859
    %v998 = vpack.c.b16 %v862, %v861
    %v999 = vpack.c.b16 %v864, %v863
    %v1000 = vpack.c.b16 %v866, %v865
    %v1001 = vpack.c.b16 %v868, %v867
    %v1002 = vpack.c.b16 %v870, %v869
    %v1003 = vpack.c.b16 %v872, %v871
    %v1004 = vpack.c.b16 %v874, %v873
    %v1005 = vpack.c.b16 %v876, %v875
    %v1006 = vpack.c.b16 %v878, %v877
    %v1151 = vunpack.c.l.b16 %v344
    %v1152 = vunpack.c.l.b16 %v345
    %v1153 = vunpack.c.l.b16 %v346
    %v1154 = vunpack.c.l.b16 %v347
    %v1155 = vunpack.c.l.b16 %v348
    %v1156 = vunpack.c.l.b16 %v349
    %v1157 = vunpack.c.l.b16 %v350
    %v1158 = vunpack.c.l.b16 %v351
    %v1159 = vunpack.c.l.b16 %v352
    %v1160 = vunpack.c.l.b16 %v353
    %v1161 = vunpack.c.l.b16 %v354
    %v1162 = vunpack.c.l.b16 %v355
    %v1163 = vunpack.c.l.b16 %v356
    %v1164 = vunpack.c.l.b16 %v357
    %v1165 = vunpack.c.l.b16 %v358
    %v1166 = vunpack.c.l.b16 %v359
    %v1167 = vpack.c.b16 %v1152, %v1151
    %v1168 = vpack.c.b16 %v1154, %v1153
    %v1169 = vpack.c.b16 %v1156, %v1155
    %v1170 = vpack.c.b16 %v1158, %v1157
    %v1171 = vpack.c.b16 %v1160, %v1159
    %v1172 = vpack.c.b16 %v1162, %v1161
    %v1173 = vpack.c.b16 %v1164, %v1163
    %v1174 = vpack.c.b16 %v1166, %v1165
    %1183 = vmatprep.subr.bf16.mxu0 0
    %1184 = vmatpush1.bf16.msra.mxu0 %v1167
    %1185 = vmatprep.subr.bf16.mxu0 0
    %1186 = vmatpush1.bf16.msra.mxu0 %v1168
    %1187 = vmatprep.subr.bf16.mxu0 0
    %1188 = vmatpush1.bf16.msra.mxu0 %v1169
    %1189 = vmatprep.subr.bf16.mxu0 0
    %1190 = vmatpush1.bf16.msra.mxu0 %v1170
    %1191 = vmatprep.subr.bf16.mxu0 0
    %1192 = vmatpush1.bf16.msra.mxu0 %v1171
    %1193 = vmatprep.subr.bf16.mxu0 0
    %1194 = vmatpush1.bf16.msra.mxu0 %v1172
    %1195 = vmatprep.subr.bf16.mxu0 0
    %1196 = vmatpush1.bf16.msra.mxu0 %v1173
    %1197 = vmatprep.subr.bf16.mxu0 0
    %1198 = vmatpush1.bf16.msra.mxu0 %v1174
    %1199 = vmatprep.subr.bf16.mxu0 0
    %1200 = vmatpush1.bf16.msra.mxu0 0
    %1201 = vmatprep.subr.bf16.mxu0 0
    %1202 = vmatpush1.bf16.msra.mxu0 0
    %1203 = vmatprep.subr.bf16.mxu0 0
    %1204 = vmatpush1.bf16.msra.mxu0 0
    %1205 = vmatprep.subr.bf16.mxu0 0
    %1206 = vmatpush1.bf16.msra.mxu0 0
    %1207 = vmatprep.subr.bf16.mxu0 0
    %1208 = vmatpush1.bf16.msra.mxu0 0
    %1209 = vmatprep.subr.bf16.mxu0 0
    %1210 = vmatpush1.bf16.msra.mxu0 0
    %1211 = vmatprep.subr.bf16.mxu0 0
    %1212 = vmatpush1.bf16.msra.mxu0 0
    %1213 = vmatprep.subr.bf16.mxu0 0
    %1214 = vmatpush1.bf16.msra.mxu0 0
    %1215 = vmatprep.mubr.bf16.mxu0 0
    %1216 = vmatmul.mubr.bf16.gmra.mrb[0].mxu0 %v879
    %v1217 = vpop.f32.mrb[0].mxu0
    %v1218 = vadd.f32 %v365, %v1217
    %v1219 = vpop.f32.mrb[0].mxu0
    %v1220 = vpop.f32.mrb[0].mxu0
    %v1221 = vadd.f32 %v365, %v1220
    %v1222 = vpop.f32.mrb[0].mxu0
    %1223 = vmatprep.mubr.bf16.mxu0 0
    %1224 = vmatmul.mubr.bf16.gmra.mrb[0].mxu0 %v880
    %v1225 = vpop.f32.mrb[0].mxu0
    %v1226 = vadd.f32 %v365, %v1225
    %v1227 = vpop.f32.mrb[0].mxu0
    %v1228 = vpop.f32.mrb[0].mxu0
    %v1229 = vadd.f32 %v365, %v1228
    %v1230 = vpop.f32.mrb[0].mxu0
    %1231 = vmatprep.mubr.bf16.mxu0 0
    %1232 = vmatmul.mubr.bf16.gmra.mrb[0].mxu0 %v881
    %v1233 = vpop.f32.mrb[0].mxu0
    %v1234 = vadd.f32 %v365, %v1233
    %v1235 = vpop.f32.mrb[0].mxu0
    %v1236 = vpop.f32.mrb[0].mxu0
    %v1237 = vadd.f32 %v365, %v1236
    %v1238 = vpop.f32.mrb[0].mxu0
    %1239 = vmatprep.mubr.bf16.mxu0 0
    %1240 = vmatmul.mubr.bf16.gmra.mrb[0].mxu0 %v882
    %v1241 = vpop.f32.mrb[0].mxu0
    %v1242 = vadd.f32 %v365, %v1241
    %v1243 = vpop.f32.mrb[0].mxu0
    %v1244 = vpop.f32.mrb[0].mxu0
    %v1245 = vadd.f32 %v365, %v1244
    %v1246 = vpop.f32.mrb[0].mxu0
    %1247 = vmatprep.mubr.bf16.mxu0 0
    %1248 = vmatmul.mubr.bf16.gmra.mrb[0].mxu0 %v883
    %v1249 = vpop.f32.mrb[0].mxu0
    %v1250 = vadd.f32 %v365, %v1249
    %v1251 = vpop.f32.mrb[0].mxu0
    %v1252 = vpop.f32.mrb[0].mxu0
    %v1253 = vadd.f32 %v365, %v1252
    %v1254 = vpop.f32.mrb[0].mxu0
    %1255 = vmatprep.mubr.bf16.mxu0 0
    %1256 = vmatmul.mubr.bf16.gmra.mrb[0].mxu0 %v884
    %v1257 = vpop.f32.mrb[0].mxu0
    %v1258 = vadd.f32 %v365, %v1257
    %v1259 = vpop.f32.mrb[0].mxu0
    %v1260 = vpop.f32.mrb[0].mxu0
    %v1261 = vadd.f32 %v365, %v1260
    %v1262 = vpop.f32.mrb[0].mxu0
    %1263 = vmatprep.mubr.bf16.mxu0 0
    %1264 = vmatmul.mubr.bf16.gmra.mrb[0].mxu0 %v885
    %v1265 = vpop.f32.mrb[0].mxu0
    %v1266 = vadd.f32 %v365, %v1265
    %v1267 = vpop.f32.mrb[0].mxu0
    %v1268 = vpop.f32.mrb[0].mxu0
    %v1269 = vadd.f32 %v365, %v1268
    %v1270 = vpop.f32.mrb[0].mxu0
    %1271 = vmatprep.mubr.bf16.mxu0 0
    %1272 = vmatmul.mubr.bf16.gmra.mrb[0].mxu0 %v886
    %v1273 = vpop.f32.mrb[0].mxu0
    %v1274 = vadd.f32 %v365, %v1273
    %v1275 = vpop.f32.mrb[0].mxu0
    %v1276 = vpop.f32.mrb[0].mxu0
    %v1277 = vadd.f32 %v365, %v1276
    %v1278 = vpop.f32.mrb[0].mxu0
    %1279 = vmatprep.mubr.bf16.mxu0 0
    %1280 = vmatmul.mubr.bf16.gmra.mrb[0].mxu0 %v887
    %v1281 = vpop.f32.mrb[0].mxu0
    %v1282 = vadd.f32 %v365, %v1281
    %v1283 = vpop.f32.mrb[0].mxu0
    %v1284 = vpop.f32.mrb[0].mxu0
    %v1285 = vadd.f32 %v365, %v1284
    %v1286 = vpop.f32.mrb[0].mxu0
    %1287 = vmatprep.mubr.bf16.mxu0 0
    %1288 = vmatmul.mubr.bf16.gmra.mrb[0].mxu0 %v888
    %v1289 = vpop.f32.mrb[0].mxu0
    %v1290 = vadd.f32 %v365, %v1289
    %v1291 = vpop.f32.mrb[0].mxu0
    %v1292 = vpop.f32.mrb[0].mxu0
    %v1293 = vadd.f32 %v365, %v1292
    %v1294 = vpop.f32.mrb[0].mxu0
    %1295 = vmatprep.mubr.bf16.mxu0 0
    %1296 = vmatmul.mubr.bf16.gmra.mrb[0].mxu0 %v889
    %v1297 = vpop.f32.mrb[0].mxu0
    %v1298 = vadd.f32 %v365, %v1297
    %v1299 = vpop.f32.mrb[0].mxu0
    %v1300 = vpop.f32.mrb[0].mxu0
    %v1301 = vadd.f32 %v365, %v1300
    %v1302 = vpop.f32.mrb[0].mxu0
    %1303 = vmatprep.mubr.bf16.mxu0 0
    %1304 = vmatmul.mubr.bf16.gmra.mrb[0].mxu0 %v890
    %v1305 = vpop.f32.mrb[0].mxu0
    %v1306 = vadd.f32 %v365, %v1305
    %v1307 = vpop.f32.mrb[0].mxu0
    %v1308 = vpop.f32.mrb[0].mxu0
    %v1309 = vadd.f32 %v365, %v1308
    %v1310 = vpop.f32.mrb[0].mxu0
    %1311 = vmatprep.mubr.bf16.mxu0 0
    %1312 = vmatmul.mubr.bf16.gmra.mrb[0].mxu0 %v891
    %v1313 = vpop.f32.mrb[0].mxu0
    %v1314 = vadd.f32 %v365, %v1313
    %v1315 = vpop.f32.mrb[0].mxu0
    %v1316 = vpop.f32.mrb[0].mxu0
    %v1317 = vadd.f32 %v365, %v1316
    %v1318 = vpop.f32.mrb[0].mxu0
    %1319 = vmatprep.mubr.bf16.mxu0 0
    %1320 = vmatmul.mubr.bf16.gmra.mrb[0].mxu0 %v892
    %v1321 = vpop.f32.mrb[0].mxu0
    %v1322 = vadd.f32 %v365, %v1321
    %v1323 = vpop.f32.mrb[0].mxu0
    %v1324 = vpop.f32.mrb[0].mxu0
    %v1325 = vadd.f32 %v365, %v1324
    %v1326 = vpop.f32.mrb[0].mxu0
    %1327 = vmatprep.mubr.bf16.mxu0 0
    %1328 = vmatmul.mubr.bf16.gmra.mrb[0].mxu0 %v893
    %v1329 = vpop.f32.mrb[0].mxu0
    %v1330 = vadd.f32 %v365, %v1329
    %v1331 = vpop.f32.mrb[0].mxu0
    %v1332 = vpop.f32.mrb[0].mxu0
    %v1333 = vadd.f32 %v365, %v1332
    %v1334 = vpop.f32.mrb[0].mxu0
    %1335 = vmatprep.mubr.bf16.mxu0 0
    %1336 = vmatmul.mubr.bf16.gmra.mrb[0].mxu0 %v894
    %v1337 = vpop.f32.mrb[0].mxu0
    %v1338 = vadd.f32 %v365, %v1337
    %v1339 = vpop.f32.mrb[0].mxu0
    %v1340 = vpop.f32.mrb[0].mxu0
    %v1341 = vadd.f32 %v365, %v1340
    %v1342 = vpop.f32.mrb[0].mxu0
    %1343 = vmatprep.mubr.bf16.mxu0 0
    %1344 = vmatmul.mubr.bf16.gmra.mrb[0].mxu0 %v895
    %v1345 = vpop.f32.mrb[0].mxu0
    %v1346 = vadd.f32 %v365, %v1345
    %v1347 = vpop.f32.mrb[0].mxu0
    %v1348 = vpop.f32.mrb[0].mxu0
    %v1349 = vadd.f32 %v365, %v1348
    %v1350 = vpop.f32.mrb[0].mxu0
    %1351 = vmatprep.mubr.bf16.mxu0 0
    %1352 = vmatmul.mubr.bf16.gmra.mrb[0].mxu0 %v896
    %v1353 = vpop.f32.mrb[0].mxu0
    %v1354 = vadd.f32 %v365, %v1353
    %v1355 = vpop.f32.mrb[0].mxu0
    %v1356 = vpop.f32.mrb[0].mxu0
    %v1357 = vadd.f32 %v365, %v1356
    %v1358 = vpop.f32.mrb[0].mxu0
    %1359 = vmatprep.mubr.bf16.mxu0 0
    %1360 = vmatmul.mubr.bf16.gmra.mrb[0].mxu0 %v897
    %v1361 = vpop.f32.mrb[0].mxu0
    %v1362 = vadd.f32 %v365, %v1361
    %v1363 = vpop.f32.mrb[0].mxu0
    %v1364 = vpop.f32.mrb[0].mxu0
    %v1365 = vadd.f32 %v365, %v1364
    %v1366 = vpop.f32.mrb[0].mxu0
    %1367 = vmatprep.mubr.bf16.mxu0 0
    %1368 = vmatmul.mubr.bf16.gmra.mrb[0].mxu0 %v898
    %v1369 = vpop.f32.mrb[0].mxu0
    %v1370 = vadd.f32 %v365, %v1369
    %v1371 = vpop.f32.mrb[0].mxu0
    %v1372 = vpop.f32.mrb[0].mxu0
    %v1373 = vadd.f32 %v365, %v1372
    %v1374 = vpop.f32.mrb[0].mxu0
    %1375 = vmatprep.mubr.bf16.mxu0 0
    %1376 = vmatmul.mubr.bf16.gmra.mrb[0].mxu0 %v899
    %v1377 = vpop.f32.mrb[0].mxu0
    %v1378 = vadd.f32 %v365, %v1377
    %v1379 = vpop.f32.mrb[0].mxu0
    %v1380 = vpop.f32.mrb[0].mxu0
    %v1381 = vadd.f32 %v365, %v1380
    %v1382 = vpop.f32.mrb[0].mxu0
    %1383 = vmatprep.mubr.bf16.mxu0 0
    %1384 = vmatmul.mubr.bf16.gmra.mrb[0].mxu0 %v900
    %v1385 = vpop.f32.mrb[0].mxu0
    %v1386 = vadd.f32 %v365, %v1385
    %v1387 = vpop.f32.mrb[0].mxu0
    %v1388 = vpop.f32.mrb[0].mxu0
    %v1389 = vadd.f32 %v365, %v1388
    %v1390 = vpop.f32.mrb[0].mxu0
    %1391 = vmatprep.mubr.bf16.mxu0 0
    %1392 = vmatmul.mubr.bf16.gmra.mrb[0].mxu0 %v901
    %v1393 = vpop.f32.mrb[0].mxu0
    %v1394 = vadd.f32 %v365, %v1393
    %v1395 = vpop.f32.mrb[0].mxu0
    %v1396 = vpop.f32.mrb[0].mxu0
    %v1397 = vadd.f32 %v365, %v1396
    %v1398 = vpop.f32.mrb[0].mxu0
    %1399 = vmatprep.mubr.bf16.mxu0 0
    %1400 = vmatmul.mubr.bf16.gmra.mrb[0].mxu0 %v902
    %v1401 = vpop.f32.mrb[0].mxu0
    %v1402 = vadd.f32 %v365, %v1401
    %v1403 = vpop.f32.mrb[0].mxu0
    %v1404 = vpop.f32.mrb[0].mxu0
    %v1405 = vadd.f32 %v365, %v1404
    %v1406 = vpop.f32.mrb[0].mxu0
    %1407 = vmatprep.mubr.bf16.mxu0 0
    %1408 = vmatmul.mubr.bf16.gmra.mrb[0].mxu0 %v903
    %v1409 = vpop.f32.mrb[0].mxu0
    %v1410 = vadd.f32 %v365, %v1409
    %v1411 = vpop.f32.mrb[0].mxu0
    %v1412 = vpop.f32.mrb[0].mxu0
    %v1413 = vadd.f32 %v365, %v1412
    %v1414 = vpop.f32.mrb[0].mxu0
    %1415 = vmatprep.mubr.bf16.mxu0 0
    %1416 = vmatmul.mubr.bf16.gmra.mrb[0].mxu0 %v904
    %v1417 = vpop.f32.mrb[0].mxu0
    %v1418 = vadd.f32 %v365, %v1417
    %v1419 = vpop.f32.mrb[0].mxu0
    %v1420 = vpop.f32.mrb[0].mxu0
    %v1421 = vadd.f32 %v365, %v1420
    %v1422 = vpop.f32.mrb[0].mxu0
    %1423 = vmatprep.mubr.bf16.mxu0 0
    %1424 = vmatmul.mubr.bf16.gmra.mrb[0].mxu0 %v905
    %v1425 = vpop.f32.mrb[0].mxu0
    %v1426 = vadd.f32 %v365, %v1425
    %v1427 = vpop.f32.mrb[0].mxu0
    %v1428 = vpop.f32.mrb[0].mxu0
    %v1429 = vadd.f32 %v365, %v1428
    %v1430 = vpop.f32.mrb[0].mxu0
    %1431 = vmatprep.mubr.bf16.mxu0 0
    %1432 = vmatmul.mubr.bf16.gmra.mrb[0].mxu0 %v906
    %v1433 = vpop.f32.mrb[0].mxu0
    %v1434 = vadd.f32 %v365, %v1433
    %v1435 = vpop.f32.mrb[0].mxu0
    %v1436 = vpop.f32.mrb[0].mxu0
    %v1437 = vadd.f32 %v365, %v1436
    %v1438 = vpop.f32.mrb[0].mxu0
    %1439 = vmatprep.mubr.bf16.mxu0 0
    %1440 = vmatmul.mubr.bf16.gmra.mrb[0].mxu0 %v907
    %v1441 = vpop.f32.mrb[0].mxu0
    %v1442 = vadd.f32 %v365, %v1441
    %v1443 = vpop.f32.mrb[0].mxu0
    %v1444 = vpop.f32.mrb[0].mxu0
    %v1445 = vadd.f32 %v365, %v1444
    %v1446 = vpop.f32.mrb[0].mxu0
    %1447 = vmatprep.mubr.bf16.mxu0 0
    %1448 = vmatmul.mubr.bf16.gmra.mrb[0].mxu0 %v908
    %v1449 = vpop.f32.mrb[0].mxu0
    %v1450 = vadd.f32 %v365, %v1449
    %v1451 = vpop.f32.mrb[0].mxu0
    %v1452 = vpop.f32.mrb[0].mxu0
    %v1453 = vadd.f32 %v365, %v1452
    %v1454 = vpop.f32.mrb[0].mxu0
    %1455 = vmatprep.mubr.bf16.mxu0 0
    %1456 = vmatmul.mubr.bf16.gmra.mrb[0].mxu0 %v909
    %v1457 = vpop.f32.mrb[0].mxu0
    %v1458 = vadd.f32 %v365, %v1457
    %v1459 = vpop.f32.mrb[0].mxu0
    %v1460 = vpop.f32.mrb[0].mxu0
    %v1461 = vadd.f32 %v365, %v1460
    %v1462 = vpop.f32.mrb[0].mxu0
    %1463 = vmatprep.mubr.bf16.mxu0 0
    %1464 = vmatmul.mubr.bf16.gmra.mrb[0].mxu0 %v910
    %v1465 = vpop.f32.mrb[0].mxu0
    %v1466 = vadd.f32 %v365, %v1465
    %v1467 = vpop.f32.mrb[0].mxu0
    %v1468 = vpop.f32.mrb[0].mxu0
    %v1469 = vadd.f32 %v365, %v1468
    %v1470 = vpop.f32.mrb[0].mxu0
    %1471 = vmatprep.mubr.bf16.mxu0 0
    %1472 = vmatmul.mubr.bf16.gmra.mrb[0].mxu0 %v911
    %v1473 = vpop.f32.mrb[0].mxu0
    %v1474 = vadd.f32 %v365, %v1473
    %v1475 = vpop.f32.mrb[0].mxu0
    %v1476 = vpop.f32.mrb[0].mxu0
    %v1477 = vadd.f32 %v365, %v1476
    %v1478 = vpop.f32.mrb[0].mxu0
    %1479 = vmatprep.mubr.bf16.mxu0 0
    %1480 = vmatmul.mubr.bf16.gmra.mrb[0].mxu0 %v912
    %v1481 = vpop.f32.mrb[0].mxu0
    %v1482 = vadd.f32 %v365, %v1481
    %v1483 = vpop.f32.mrb[0].mxu0
    %v1484 = vpop.f32.mrb[0].mxu0
    %v1485 = vadd.f32 %v365, %v1484
    %v1486 = vpop.f32.mrb[0].mxu0
    %1487 = vmatprep.mubr.bf16.mxu0 0
    %1488 = vmatmul.mubr.bf16.gmra.mrb[0].mxu0 %v913
    %v1489 = vpop.f32.mrb[0].mxu0
    %v1490 = vadd.f32 %v365, %v1489
    %v1491 = vpop.f32.mrb[0].mxu0
    %v1492 = vpop.f32.mrb[0].mxu0
    %v1493 = vadd.f32 %v365, %v1492
    %v1494 = vpop.f32.mrb[0].mxu0
    %1495 = vmatprep.mubr.bf16.mxu0 0
    %1496 = vmatmul.mubr.bf16.gmra.mrb[0].mxu0 %v914
    %v1497 = vpop.f32.mrb[0].mxu0
    %v1498 = vadd.f32 %v365, %v1497
    %v1499 = vpop.f32.mrb[0].mxu0
    %v1500 = vpop.f32.mrb[0].mxu0
    %v1501 = vadd.f32 %v365, %v1500
    %v1502 = vpop.f32.mrb[0].mxu0
    %1503 = vmatprep.mubr.bf16.mxu0 0
    %1504 = vmatmul.mubr.bf16.gmra.mrb[0].mxu0 %v915
    %v1505 = vpop.f32.mrb[0].mxu0
    %v1506 = vadd.f32 %v365, %v1505
    %v1507 = vpop.f32.mrb[0].mxu0
    %v1508 = vpop.f32.mrb[0].mxu0
    %v1509 = vadd.f32 %v365, %v1508
    %v1510 = vpop.f32.mrb[0].mxu0
    %1511 = vmatprep.mubr.bf16.mxu0 0
    %1512 = vmatmul.mubr.bf16.gmra.mrb[0].mxu0 %v916
    %v1513 = vpop.f32.mrb[0].mxu0
    %v1514 = vadd.f32 %v365, %v1513
    %v1515 = vpop.f32.mrb[0].mxu0
    %v1516 = vpop.f32.mrb[0].mxu0
    %v1517 = vadd.f32 %v365, %v1516
    %v1518 = vpop.f32.mrb[0].mxu0
    %1519 = vmatprep.mubr.bf16.mxu0 0
    %1520 = vmatmul.mubr.bf16.gmra.mrb[0].mxu0 %v917
    %v1521 = vpop.f32.mrb[0].mxu0
    %v1522 = vadd.f32 %v365, %v1521
    %v1523 = vpop.f32.mrb[0].mxu0
    %v1524 = vpop.f32.mrb[0].mxu0
    %v1525 = vadd.f32 %v365, %v1524
    %v1526 = vpop.f32.mrb[0].mxu0
    %1527 = vmatprep.mubr.bf16.mxu0 0
    %1528 = vmatmul.mubr.bf16.gmra.mrb[0].mxu0 %v918
    %v1529 = vpop.f32.mrb[0].mxu0
    %v1530 = vadd.f32 %v365, %v1529
    %v1531 = vpop.f32.mrb[0].mxu0
    %v1532 = vpop.f32.mrb[0].mxu0
    %v1533 = vadd.f32 %v365, %v1532
    %v1534 = vpop.f32.mrb[0].mxu0
    %1535 = vmatprep.mubr.bf16.mxu0 0
    %1536 = vmatmul.mubr.bf16.gmra.mrb[0].mxu0 %v919
    %v1537 = vpop.f32.mrb[0].mxu0
    %v1538 = vadd.f32 %v365, %v1537
    %v1539 = vpop.f32.mrb[0].mxu0
    %v1540 = vpop.f32.mrb[0].mxu0
    %v1541 = vadd.f32 %v365, %v1540
    %v1542 = vpop.f32.mrb[0].mxu0
    %1543 = vmatprep.mubr.bf16.mxu0 0
    %1544 = vmatmul.mubr.bf16.gmra.mrb[0].mxu0 %v920
    %v1545 = vpop.f32.mrb[0].mxu0
    %v1546 = vadd.f32 %v365, %v1545
    %v1547 = vpop.f32.mrb[0].mxu0
    %v1548 = vpop.f32.mrb[0].mxu0
    %v1549 = vadd.f32 %v365, %v1548
    %v1550 = vpop.f32.mrb[0].mxu0
    %1551 = vmatprep.mubr.bf16.mxu0 0
    %1552 = vmatmul.mubr.bf16.gmra.mrb[0].mxu0 %v921
    %v1553 = vpop.f32.mrb[0].mxu0
    %v1554 = vadd.f32 %v365, %v1553
    %v1555 = vpop.f32.mrb[0].mxu0
    %v1556 = vpop.f32.mrb[0].mxu0
    %v1557 = vadd.f32 %v365, %v1556
    %v1558 = vpop.f32.mrb[0].mxu0
    %1559 = vmatprep.mubr.bf16.mxu0 0
    %1560 = vmatmul.mubr.bf16.gmra.mrb[0].mxu0 %v922
    %v1561 = vpop.f32.mrb[0].mxu0
    %v1562 = vadd.f32 %v365, %v1561
    %v1563 = vpop.f32.mrb[0].mxu0
    %v1564 = vpop.f32.mrb[0].mxu0
    %v1565 = vadd.f32 %v365, %v1564
    %v1566 = vpop.f32.mrb[0].mxu0
    %1567 = vmatprep.mubr.bf16.mxu0 0
    %1568 = vmatmul.mubr.bf16.gmra.mrb[0].mxu0 %v923
    %v1569 = vpop.f32.mrb[0].mxu0
    %v1570 = vadd.f32 %v365, %v1569
    %v1571 = vpop.f32.mrb[0].mxu0
    %v1572 = vpop.f32.mrb[0].mxu0
    %v1573 = vadd.f32 %v365, %v1572
    %v1574 = vpop.f32.mrb[0].mxu0
    %1575 = vmatprep.mubr.bf16.mxu0 0
    %1576 = vmatmul.mubr.bf16.gmra.mrb[0].mxu0 %v924
    %v1577 = vpop.f32.mrb[0].mxu0
    %v1578 = vadd.f32 %v365, %v1577
    %v1579 = vpop.f32.mrb[0].mxu0
    %v1580 = vpop.f32.mrb[0].mxu0
    %v1581 = vadd.f32 %v365, %v1580
    %v1582 = vpop.f32.mrb[0].mxu0
    %1583 = vmatprep.mubr.bf16.mxu0 0
    %1584 = vmatmul.mubr.bf16.gmra.mrb[0].mxu0 %v925
    %v1585 = vpop.f32.mrb[0].mxu0
    %v1586 = vadd.f32 %v365, %v1585
    %v1587 = vpop.f32.mrb[0].mxu0
    %v1588 = vpop.f32.mrb[0].mxu0
    %v1589 = vadd.f32 %v365, %v1588
    %v1590 = vpop.f32.mrb[0].mxu0
    %1591 = vmatprep.mubr.bf16.mxu0 0
    %1592 = vmatmul.mubr.bf16.gmra.mrb[0].mxu0 %v926
    %v1593 = vpop.f32.mrb[0].mxu0
    %v1594 = vadd.f32 %v365, %v1593
    %v1595 = vpop.f32.mrb[0].mxu0
    %v1596 = vpop.f32.mrb[0].mxu0
    %v1597 = vadd.f32 %v365, %v1596
    %v1598 = vpop.f32.mrb[0].mxu0
    %1599 = vmatprep.mubr.bf16.mxu0 0
    %1600 = vmatmul.mubr.bf16.gmra.mrb[0].mxu0 %v927
    %v1601 = vpop.f32.mrb[0].mxu0
    %v1602 = vadd.f32 %v365, %v1601
    %v1603 = vpop.f32.mrb[0].mxu0
    %v1604 = vpop.f32.mrb[0].mxu0
    %v1605 = vadd.f32 %v365, %v1604
    %v1606 = vpop.f32.mrb[0].mxu0
    %1607 = vmatprep.mubr.bf16.mxu0 0
    %1608 = vmatmul.mubr.bf16.gmra.mrb[0].mxu0 %v928
    %v1609 = vpop.f32.mrb[0].mxu0
    %v1610 = vadd.f32 %v365, %v1609
    %v1611 = vpop.f32.mrb[0].mxu0
    %v1612 = vpop.f32.mrb[0].mxu0
    %v1613 = vadd.f32 %v365, %v1612
    %v1614 = vpop.f32.mrb[0].mxu0
    %1615 = vmatprep.mubr.bf16.mxu0 0
    %1616 = vmatmul.mubr.bf16.gmra.mrb[0].mxu0 %v929
    %v1617 = vpop.f32.mrb[0].mxu0
    %v1618 = vadd.f32 %v365, %v1617
    %v1619 = vpop.f32.mrb[0].mxu0
    %v1620 = vpop.f32.mrb[0].mxu0
    %v1621 = vadd.f32 %v365, %v1620
    %v1622 = vpop.f32.mrb[0].mxu0
    %1623 = vmatprep.mubr.bf16.mxu0 0
    %1624 = vmatmul.mubr.bf16.gmra.mrb[0].mxu0 %v930
    %v1625 = vpop.f32.mrb[0].mxu0
    %v1626 = vadd.f32 %v365, %v1625
    %v1627 = vpop.f32.mrb[0].mxu0
    %v1628 = vpop.f32.mrb[0].mxu0
    %v1629 = vadd.f32 %v365, %v1628
    %v1630 = vpop.f32.mrb[0].mxu0
    %1631 = vmatprep.mubr.bf16.mxu0 0
    %1632 = vmatmul.mubr.bf16.gmra.mrb[0].mxu0 %v931
    %v1633 = vpop.f32.mrb[0].mxu0
    %v1634 = vadd.f32 %v365, %v1633
    %v1635 = vpop.f32.mrb[0].mxu0
    %v1636 = vpop.f32.mrb[0].mxu0
    %v1637 = vadd.f32 %v365, %v1636
    %v1638 = vpop.f32.mrb[0].mxu0
    %1639 = vmatprep.mubr.bf16.mxu0 0
    %1640 = vmatmul.mubr.bf16.gmra.mrb[0].mxu0 %v932
    %v1641 = vpop.f32.mrb[0].mxu0
    %v1642 = vadd.f32 %v365, %v1641
    %v1643 = vpop.f32.mrb[0].mxu0
    %v1644 = vpop.f32.mrb[0].mxu0
    %v1645 = vadd.f32 %v365, %v1644
    %v1646 = vpop.f32.mrb[0].mxu0
    %1647 = vmatprep.mubr.bf16.mxu0 0
    %1648 = vmatmul.mubr.bf16.gmra.mrb[0].mxu0 %v933
    %v1649 = vpop.f32.mrb[0].mxu0
    %v1650 = vadd.f32 %v365, %v1649
    %v1651 = vpop.f32.mrb[0].mxu0
    %v1652 = vpop.f32.mrb[0].mxu0
    %v1653 = vadd.f32 %v365, %v1652
    %v1654 = vpop.f32.mrb[0].mxu0
    %1655 = vmatprep.mubr.bf16.mxu0 0
    %1656 = vmatmul.mubr.bf16.gmra.mrb[0].mxu0 %v934
    %v1657 = vpop.f32.mrb[0].mxu0
    %v1658 = vadd.f32 %v365, %v1657
    %v1659 = vpop.f32.mrb[0].mxu0
    %v1660 = vpop.f32.mrb[0].mxu0
    %v1661 = vadd.f32 %v365, %v1660
    %v1662 = vpop.f32.mrb[0].mxu0
    %1663 = vmatprep.mubr.bf16.mxu0 0
    %1664 = vmatmul.mubr.bf16.gmra.mrb[0].mxu0 %v935
    %v1665 = vpop.f32.mrb[0].mxu0
    %v1666 = vadd.f32 %v365, %v1665
    %v1667 = vpop.f32.mrb[0].mxu0
    %v1668 = vpop.f32.mrb[0].mxu0
    %v1669 = vadd.f32 %v365, %v1668
    %v1670 = vpop.f32.mrb[0].mxu0
    %1671 = vmatprep.mubr.bf16.mxu0 0
    %1672 = vmatmul.mubr.bf16.gmra.mrb[0].mxu0 %v936
    %v1673 = vpop.f32.mrb[0].mxu0
    %v1674 = vadd.f32 %v365, %v1673
    %v1675 = vpop.f32.mrb[0].mxu0
    %v1676 = vpop.f32.mrb[0].mxu0
    %v1677 = vadd.f32 %v365, %v1676
    %v1678 = vpop.f32.mrb[0].mxu0
    %1679 = vmatprep.mubr.bf16.mxu0 0
    %1680 = vmatmul.mubr.bf16.gmra.mrb[0].mxu0 %v937
    %v1681 = vpop.f32.mrb[0].mxu0
    %v1682 = vadd.f32 %v365, %v1681
    %v1683 = vpop.f32.mrb[0].mxu0
    %v1684 = vpop.f32.mrb[0].mxu0
    %v1685 = vadd.f32 %v365, %v1684
    %v1686 = vpop.f32.mrb[0].mxu0
    %1687 = vmatprep.mubr.bf16.mxu0 0
    %1688 = vmatmul.mubr.bf16.gmra.mrb[0].mxu0 %v938
    %v1689 = vpop.f32.mrb[0].mxu0
    %v1690 = vadd.f32 %v365, %v1689
    %v1691 = vpop.f32.mrb[0].mxu0
    %v1692 = vpop.f32.mrb[0].mxu0
    %v1693 = vadd.f32 %v365, %v1692
    %v1694 = vpop.f32.mrb[0].mxu0
    %1695 = vmatprep.mubr.bf16.mxu0 0
    %1696 = vmatmul.mubr.bf16.gmra.mrb[0].mxu0 %v939
    %v1697 = vpop.f32.mrb[0].mxu0
    %v1698 = vadd.f32 %v365, %v1697
    %v1699 = vpop.f32.mrb[0].mxu0
    %v1700 = vpop.f32.mrb[0].mxu0
    %v1701 = vadd.f32 %v365, %v1700
    %v1702 = vpop.f32.mrb[0].mxu0
    %1703 = vmatprep.mubr.bf16.mxu0 0
    %1704 = vmatmul.mubr.bf16.gmra.mrb[0].mxu0 %v940
    %v1705 = vpop.f32.mrb[0].mxu0
    %v1706 = vadd.f32 %v365, %v1705
    %v1707 = vpop.f32.mrb[0].mxu0
    %v1708 = vpop.f32.mrb[0].mxu0
    %v1709 = vadd.f32 %v365, %v1708
    %v1710 = vpop.f32.mrb[0].mxu0
    %1711 = vmatprep.mubr.bf16.mxu0 0
    %1712 = vmatmul.mubr.bf16.gmra.mrb[0].mxu0 %v941
    %v1713 = vpop.f32.mrb[0].mxu0
    %v1714 = vadd.f32 %v365, %v1713
    %v1715 = vpop.f32.mrb[0].mxu0
    %v1716 = vpop.f32.mrb[0].mxu0
    %v1717 = vadd.f32 %v365, %v1716
    %v1718 = vpop.f32.mrb[0].mxu0
    %1719 = vmatprep.mubr.bf16.mxu0 0
    %1720 = vmatmul.mubr.bf16.gmra.mrb[0].mxu0 %v942
    %v1721 = vpop.f32.mrb[0].mxu0
    %v1722 = vadd.f32 %v365, %v1721
    %v1723 = vpop.f32.mrb[0].mxu0
    %v1724 = vpop.f32.mrb[0].mxu0
    %v1725 = vadd.f32 %v365, %v1724
    %v1726 = vpop.f32.mrb[0].mxu0
    %1727 = vmatprep.mubr.bf16.mxu0 0
    %1728 = vmatmul.mubr.bf16.gmra.mrb[0].mxu0 %v943
    %v1729 = vpop.f32.mrb[0].mxu0
    %v1730 = vadd.f32 %v365, %v1729
    %v1731 = vpop.f32.mrb[0].mxu0
    %v1732 = vpop.f32.mrb[0].mxu0
    %v1733 = vadd.f32 %v365, %v1732
    %v1734 = vpop.f32.mrb[0].mxu0
    %1735 = vmatprep.mubr.bf16.mxu0 0
    %1736 = vmatmul.mubr.bf16.gmra.mrb[0].mxu0 %v944
    %v1737 = vpop.f32.mrb[0].mxu0
    %v1738 = vadd.f32 %v365, %v1737
    %v1739 = vpop.f32.mrb[0].mxu0
    %v1740 = vpop.f32.mrb[0].mxu0
    %v1741 = vadd.f32 %v365, %v1740
    %v1742 = vpop.f32.mrb[0].mxu0
    %1743 = vmatprep.mubr.bf16.mxu0 0
    %1744 = vmatmul.mubr.bf16.gmra.mrb[0].mxu0 %v945
    %v1745 = vpop.f32.mrb[0].mxu0
    %v1746 = vadd.f32 %v365, %v1745
    %v1747 = vpop.f32.mrb[0].mxu0
    %v1748 = vpop.f32.mrb[0].mxu0
    %v1749 = vadd.f32 %v365, %v1748
    %v1750 = vpop.f32.mrb[0].mxu0
    %1751 = vmatprep.mubr.bf16.mxu0 0
    %1752 = vmatmul.mubr.bf16.gmra.mrb[0].mxu0 %v946
    %v1753 = vpop.f32.mrb[0].mxu0
    %v1754 = vadd.f32 %v365, %v1753
    %v1755 = vpop.f32.mrb[0].mxu0
    %v1756 = vpop.f32.mrb[0].mxu0
    %v1757 = vadd.f32 %v365, %v1756
    %v1758 = vpop.f32.mrb[0].mxu0
    %1759 = vmatprep.mubr.bf16.mxu0 0
    %1760 = vmatmul.mubr.bf16.gmra.mrb[0].mxu0 %v947
    %v1761 = vpop.f32.mrb[0].mxu0
    %v1762 = vadd.f32 %v365, %v1761
    %v1763 = vpop.f32.mrb[0].mxu0
    %v1764 = vpop.f32.mrb[0].mxu0
    %v1765 = vadd.f32 %v365, %v1764
    %v1766 = vpop.f32.mrb[0].mxu0
    %1767 = vmatprep.mubr.bf16.mxu0 0
    %1768 = vmatmul.mubr.bf16.gmra.mrb[0].mxu0 %v948
    %v1769 = vpop.f32.mrb[0].mxu0
    %v1770 = vadd.f32 %v365, %v1769
    %v1771 = vpop.f32.mrb[0].mxu0
    %v1772 = vpop.f32.mrb[0].mxu0
    %v1773 = vadd.f32 %v365, %v1772
    %v1774 = vpop.f32.mrb[0].mxu0
    %1775 = vmatprep.mubr.bf16.mxu0 0
    %1776 = vmatmul.mubr.bf16.gmra.mrb[0].mxu0 %v949
    %v1777 = vpop.f32.mrb[0].mxu0
    %v1778 = vadd.f32 %v365, %v1777
    %v1779 = vpop.f32.mrb[0].mxu0
    %v1780 = vpop.f32.mrb[0].mxu0
    %v1781 = vadd.f32 %v365, %v1780
    %v1782 = vpop.f32.mrb[0].mxu0
    %1783 = vmatprep.mubr.bf16.mxu0 0
    %1784 = vmatmul.mubr.bf16.gmra.mrb[0].mxu0 %v950
    %v1785 = vpop.f32.mrb[0].mxu0
    %v1786 = vadd.f32 %v365, %v1785
    %v1787 = vpop.f32.mrb[0].mxu0
    %v1788 = vpop.f32.mrb[0].mxu0
    %v1789 = vadd.f32 %v365, %v1788
    %v1790 = vpop.f32.mrb[0].mxu0
    %1791 = vmatprep.mubr.bf16.mxu0 0
    %1792 = vmatmul.mubr.bf16.gmra.mrb[0].mxu0 %v951
    %v1793 = vpop.f32.mrb[0].mxu0
    %v1794 = vadd.f32 %v365, %v1793
    %v1795 = vpop.f32.mrb[0].mxu0
    %v1796 = vpop.f32.mrb[0].mxu0
    %v1797 = vadd.f32 %v365, %v1796
    %v1798 = vpop.f32.mrb[0].mxu0
    %1799 = vmatprep.mubr.bf16.mxu0 0
    %1800 = vmatmul.mubr.bf16.gmra.mrb[0].mxu0 %v952
    %v1801 = vpop.f32.mrb[0].mxu0
    %v1802 = vadd.f32 %v365, %v1801
    %v1803 = vpop.f32.mrb[0].mxu0
    %v1804 = vpop.f32.mrb[0].mxu0
    %v1805 = vadd.f32 %v365, %v1804
    %v1806 = vpop.f32.mrb[0].mxu0
    %1807 = vmatprep.mubr.bf16.mxu0 0
    %1808 = vmatmul.mubr.bf16.gmra.mrb[0].mxu0 %v953
    %v1809 = vpop.f32.mrb[0].mxu0
    %v1810 = vadd.f32 %v365, %v1809
    %v1811 = vpop.f32.mrb[0].mxu0
    %v1812 = vpop.f32.mrb[0].mxu0
    %v1813 = vadd.f32 %v365, %v1812
    %v1814 = vpop.f32.mrb[0].mxu0
    %1815 = vmatprep.mubr.bf16.mxu0 0
    %1816 = vmatmul.mubr.bf16.gmra.mrb[0].mxu0 %v954
    %v1817 = vpop.f32.mrb[0].mxu0
    %v1818 = vadd.f32 %v365, %v1817
    %v1819 = vpop.f32.mrb[0].mxu0
    %v1820 = vpop.f32.mrb[0].mxu0
    %v1821 = vadd.f32 %v365, %v1820
    %v1822 = vpop.f32.mrb[0].mxu0
    %1823 = vmatprep.mubr.bf16.mxu0 0
    %1824 = vmatmul.mubr.bf16.gmra.mrb[0].mxu0 %v955
    %v1825 = vpop.f32.mrb[0].mxu0
    %v1826 = vadd.f32 %v365, %v1825
    %v1827 = vpop.f32.mrb[0].mxu0
    %v1828 = vpop.f32.mrb[0].mxu0
    %v1829 = vadd.f32 %v365, %v1828
    %v1830 = vpop.f32.mrb[0].mxu0
    %1831 = vmatprep.mubr.bf16.mxu0 0
    %1832 = vmatmul.mubr.bf16.gmra.mrb[0].mxu0 %v956
    %v1833 = vpop.f32.mrb[0].mxu0
    %v1834 = vadd.f32 %v365, %v1833
    %v1835 = vpop.f32.mrb[0].mxu0
    %v1836 = vpop.f32.mrb[0].mxu0
    %v1837 = vadd.f32 %v365, %v1836
    %v1838 = vpop.f32.mrb[0].mxu0
    %1839 = vmatprep.mubr.bf16.mxu0 0
    %1840 = vmatmul.mubr.bf16.gmra.mrb[0].mxu0 %v957
    %v1841 = vpop.f32.mrb[0].mxu0
    %v1842 = vadd.f32 %v365, %v1841
    %v1843 = vpop.f32.mrb[0].mxu0
    %v1844 = vpop.f32.mrb[0].mxu0
    %v1845 = vadd.f32 %v365, %v1844
    %v1846 = vpop.f32.mrb[0].mxu0
    %1847 = vmatprep.mubr.bf16.mxu0 0
    %1848 = vmatmul.mubr.bf16.gmra.mrb[0].mxu0 %v958
    %v1849 = vpop.f32.mrb[0].mxu0
    %v1850 = vadd.f32 %v365, %v1849
    %v1851 = vpop.f32.mrb[0].mxu0
    %v1852 = vpop.f32.mrb[0].mxu0
    %v1853 = vadd.f32 %v365, %v1852
    %v1854 = vpop.f32.mrb[0].mxu0
    %1855 = vmatprep.mubr.bf16.mxu0 0
    %1856 = vmatmul.mubr.bf16.gmra.mrb[0].mxu0 %v959
    %v1857 = vpop.f32.mrb[0].mxu0
    %v1858 = vadd.f32 %v365, %v1857
    %v1859 = vpop.f32.mrb[0].mxu0
    %v1860 = vpop.f32.mrb[0].mxu0
    %v1861 = vadd.f32 %v365, %v1860
    %v1862 = vpop.f32.mrb[0].mxu0
    %1863 = vmatprep.mubr.bf16.mxu0 0
    %1864 = vmatmul.mubr.bf16.gmra.mrb[0].mxu0 %v960
    %v1865 = vpop.f32.mrb[0].mxu0
    %v1866 = vadd.f32 %v365, %v1865
    %v1867 = vpop.f32.mrb[0].mxu0
    %v1868 = vpop.f32.mrb[0].mxu0
    %v1869 = vadd.f32 %v365, %v1868
    %v1870 = vpop.f32.mrb[0].mxu0
    %1871 = vmatprep.mubr.bf16.mxu0 0
    %1872 = vmatmul.mubr.bf16.gmra.mrb[0].mxu0 %v961
    %v1873 = vpop.f32.mrb[0].mxu0
    %v1874 = vadd.f32 %v365, %v1873
    %v1875 = vpop.f32.mrb[0].mxu0
    %v1876 = vpop.f32.mrb[0].mxu0
    %v1877 = vadd.f32 %v365, %v1876
    %v1878 = vpop.f32.mrb[0].mxu0
    %1879 = vmatprep.mubr.bf16.mxu0 0
    %1880 = vmatmul.mubr.bf16.gmra.mrb[0].mxu0 %v962
    %v1881 = vpop.f32.mrb[0].mxu0
    %v1882 = vadd.f32 %v365, %v1881
    %v1883 = vpop.f32.mrb[0].mxu0
    %v1884 = vpop.f32.mrb[0].mxu0
    %v1885 = vadd.f32 %v365, %v1884
    %v1886 = vpop.f32.mrb[0].mxu0
    %1887 = vmatprep.mubr.bf16.mxu0 0
    %1888 = vmatmul.mubr.bf16.gmra.mrb[0].mxu0 %v963
    %v1889 = vpop.f32.mrb[0].mxu0
    %v1890 = vadd.f32 %v365, %v1889
    %v1891 = vpop.f32.mrb[0].mxu0
    %v1892 = vpop.f32.mrb[0].mxu0
    %v1893 = vadd.f32 %v365, %v1892
    %v1894 = vpop.f32.mrb[0].mxu0
    %1895 = vmatprep.mubr.bf16.mxu0 0
    %1896 = vmatmul.mubr.bf16.gmra.mrb[0].mxu0 %v964
    %v1897 = vpop.f32.mrb[0].mxu0
    %v1898 = vadd.f32 %v365, %v1897
    %v1899 = vpop.f32.mrb[0].mxu0
    %v1900 = vpop.f32.mrb[0].mxu0
    %v1901 = vadd.f32 %v365, %v1900
    %v1902 = vpop.f32.mrb[0].mxu0
    %1903 = vmatprep.mubr.bf16.mxu0 0
    %1904 = vmatmul.mubr.bf16.gmra.mrb[0].mxu0 %v965
    %v1905 = vpop.f32.mrb[0].mxu0
    %v1906 = vadd.f32 %v365, %v1905
    %v1907 = vpop.f32.mrb[0].mxu0
    %v1908 = vpop.f32.mrb[0].mxu0
    %v1909 = vadd.f32 %v365, %v1908
    %v1910 = vpop.f32.mrb[0].mxu0
    %1911 = vmatprep.mubr.bf16.mxu0 0
    %1912 = vmatmul.mubr.bf16.gmra.mrb[0].mxu0 %v966
    %v1913 = vpop.f32.mrb[0].mxu0
    %v1914 = vadd.f32 %v365, %v1913
    %v1915 = vpop.f32.mrb[0].mxu0
    %v1916 = vpop.f32.mrb[0].mxu0
    %v1917 = vadd.f32 %v365, %v1916
    %v1918 = vpop.f32.mrb[0].mxu0
    %1919 = vmatprep.mubr.bf16.mxu0 0
    %1920 = vmatmul.mubr.bf16.gmra.mrb[0].mxu0 %v967
    %v1921 = vpop.f32.mrb[0].mxu0
    %v1922 = vadd.f32 %v365, %v1921
    %v1923 = vpop.f32.mrb[0].mxu0
    %v1924 = vpop.f32.mrb[0].mxu0
    %v1925 = vadd.f32 %v365, %v1924
    %v1926 = vpop.f32.mrb[0].mxu0
    %1927 = vmatprep.mubr.bf16.mxu0 0
    %1928 = vmatmul.mubr.bf16.gmra.mrb[0].mxu0 %v968
    %v1929 = vpop.f32.mrb[0].mxu0
    %v1930 = vadd.f32 %v365, %v1929
    %v1931 = vpop.f32.mrb[0].mxu0
    %v1932 = vpop.f32.mrb[0].mxu0
    %v1933 = vadd.f32 %v365, %v1932
    %v1934 = vpop.f32.mrb[0].mxu0
    %1935 = vmatprep.mubr.bf16.mxu0 0
    %1936 = vmatmul.mubr.bf16.gmra.mrb[0].mxu0 %v969
    %v1937 = vpop.f32.mrb[0].mxu0
    %v1938 = vadd.f32 %v365, %v1937
    %v1939 = vpop.f32.mrb[0].mxu0
    %v1940 = vpop.f32.mrb[0].mxu0
    %v1941 = vadd.f32 %v365, %v1940
    %v1942 = vpop.f32.mrb[0].mxu0
    %1943 = vmatprep.mubr.bf16.mxu0 0
    %1944 = vmatmul.mubr.bf16.gmra.mrb[0].mxu0 %v970
    %v1945 = vpop.f32.mrb[0].mxu0
    %v1946 = vadd.f32 %v365, %v1945
    %v1947 = vpop.f32.mrb[0].mxu0
    %v1948 = vpop.f32.mrb[0].mxu0
    %v1949 = vadd.f32 %v365, %v1948
    %v1950 = vpop.f32.mrb[0].mxu0
    %1951 = vmatprep.mubr.bf16.mxu0 0
    %1952 = vmatmul.mubr.bf16.gmra.mrb[0].mxu0 %v971
    %v1953 = vpop.f32.mrb[0].mxu0
    %v1954 = vadd.f32 %v365, %v1953
    %v1955 = vpop.f32.mrb[0].mxu0
    %v1956 = vpop.f32.mrb[0].mxu0
    %v1957 = vadd.f32 %v365, %v1956
    %v1958 = vpop.f32.mrb[0].mxu0
    %1959 = vmatprep.mubr.bf16.mxu0 0
    %1960 = vmatmul.mubr.bf16.gmra.mrb[0].mxu0 %v972
    %v1961 = vpop.f32.mrb[0].mxu0
    %v1962 = vadd.f32 %v365, %v1961
    %v1963 = vpop.f32.mrb[0].mxu0
    %v1964 = vpop.f32.mrb[0].mxu0
    %v1965 = vadd.f32 %v365, %v1964
    %v1966 = vpop.f32.mrb[0].mxu0
    %1967 = vmatprep.mubr.bf16.mxu0 0
    %1968 = vmatmul.mubr.bf16.gmra.mrb[0].mxu0 %v973
    %v1969 = vpop.f32.mrb[0].mxu0
    %v1970 = vadd.f32 %v365, %v1969
    %v1971 = vpop.f32.mrb[0].mxu0
    %v1972 = vpop.f32.mrb[0].mxu0
    %v1973 = vadd.f32 %v365, %v1972
    %v1974 = vpop.f32.mrb[0].mxu0
    %1975 = vmatprep.mubr.bf16.mxu0 0
    %1976 = vmatmul.mubr.bf16.gmra.mrb[0].mxu0 %v974
    %v1977 = vpop.f32.mrb[0].mxu0
    %v1978 = vadd.f32 %v365, %v1977
    %v1979 = vpop.f32.mrb[0].mxu0
    %v1980 = vpop.f32.mrb[0].mxu0
    %v1981 = vadd.f32 %v365, %v1980
    %v1982 = vpop.f32.mrb[0].mxu0
    %1983 = vmatprep.mubr.bf16.mxu0 0
    %1984 = vmatmul.mubr.bf16.gmra.mrb[0].mxu0 %v975
    %v1985 = vpop.f32.mrb[0].mxu0
    %v1986 = vadd.f32 %v365, %v1985
    %v1987 = vpop.f32.mrb[0].mxu0
    %v1988 = vpop.f32.mrb[0].mxu0
    %v1989 = vadd.f32 %v365, %v1988
    %v1990 = vpop.f32.mrb[0].mxu0
    %1991 = vmatprep.mubr.bf16.mxu0 0
    %1992 = vmatmul.mubr.bf16.gmra.mrb[0].mxu0 %v976
    %v1993 = vpop.f32.mrb[0].mxu0
    %v1994 = vadd.f32 %v365, %v1993
    %v1995 = vpop.f32.mrb[0].mxu0
    %v1996 = vpop.f32.mrb[0].mxu0
    %v1997 = vadd.f32 %v365, %v1996
    %v1998 = vpop.f32.mrb[0].mxu0
    %1999 = vmatprep.mubr.bf16.mxu0 0
    %2000 = vmatmul.mubr.bf16.gmra.mrb[0].mxu0 %v977
    %v2001 = vpop.f32.mrb[0].mxu0
    %v2002 = vadd.f32 %v365, %v2001
    %v2003 = vpop.f32.mrb[0].mxu0
    %v2004 = vpop.f32.mrb[0].mxu0
    %v2005 = vadd.f32 %v365, %v2004
    %v2006 = vpop.f32.mrb[0].mxu0
    %2007 = vmatprep.mubr.bf16.mxu0 0
    %2008 = vmatmul.mubr.bf16.gmra.mrb[0].mxu0 %v978
    %v2009 = vpop.f32.mrb[0].mxu0
    %v2010 = vadd.f32 %v365, %v2009
    %v2011 = vpop.f32.mrb[0].mxu0
    %v2012 = vpop.f32.mrb[0].mxu0
    %v2013 = vadd.f32 %v365, %v2012
    %v2014 = vpop.f32.mrb[0].mxu0
    %2015 = vmatprep.mubr.bf16.mxu0 0
    %2016 = vmatmul.mubr.bf16.gmra.mrb[0].mxu0 %v979
    %v2017 = vpop.f32.mrb[0].mxu0
    %v2018 = vadd.f32 %v365, %v2017
    %v2019 = vpop.f32.mrb[0].mxu0
    %v2020 = vpop.f32.mrb[0].mxu0
    %v2021 = vadd.f32 %v365, %v2020
    %v2022 = vpop.f32.mrb[0].mxu0
    %2023 = vmatprep.mubr.bf16.mxu0 0
    %2024 = vmatmul.mubr.bf16.gmra.mrb[0].mxu0 %v980
    %v2025 = vpop.f32.mrb[0].mxu0
    %v2026 = vadd.f32 %v365, %v2025
    %v2027 = vpop.f32.mrb[0].mxu0
    %v2028 = vpop.f32.mrb[0].mxu0
    %v2029 = vadd.f32 %v365, %v2028
    %v2030 = vpop.f32.mrb[0].mxu0
    %2031 = vmatprep.mubr.bf16.mxu0 0
    %2032 = vmatmul.mubr.bf16.gmra.mrb[0].mxu0 %v981
    %v2033 = vpop.f32.mrb[0].mxu0
    %v2034 = vadd.f32 %v365, %v2033
    %v2035 = vpop.f32.mrb[0].mxu0
    %v2036 = vpop.f32.mrb[0].mxu0
    %v2037 = vadd.f32 %v365, %v2036
    %v2038 = vpop.f32.mrb[0].mxu0
    %2039 = vmatprep.mubr.bf16.mxu0 0
    %2040 = vmatmul.mubr.bf16.gmra.mrb[0].mxu0 %v982
    %v2041 = vpop.f32.mrb[0].mxu0
    %v2042 = vadd.f32 %v365, %v2041
    %v2043 = vpop.f32.mrb[0].mxu0
    %v2044 = vpop.f32.mrb[0].mxu0
    %v2045 = vadd.f32 %v365, %v2044
    %v2046 = vpop.f32.mrb[0].mxu0
    %2047 = vmatprep.mubr.bf16.mxu0 0
    %2048 = vmatmul.mubr.bf16.gmra.mrb[0].mxu0 %v983
    %v2049 = vpop.f32.mrb[0].mxu0
    %v2050 = vadd.f32 %v365, %v2049
    %v2051 = vpop.f32.mrb[0].mxu0
    %v2052 = vpop.f32.mrb[0].mxu0
    %v2053 = vadd.f32 %v365, %v2052
    %v2054 = vpop.f32.mrb[0].mxu0
    %2055 = vmatprep.mubr.bf16.mxu0 0
    %2056 = vmatmul.mubr.bf16.gmra.mrb[0].mxu0 %v984
    %v2057 = vpop.f32.mrb[0].mxu0
    %v2058 = vadd.f32 %v365, %v2057
    %v2059 = vpop.f32.mrb[0].mxu0
    %v2060 = vpop.f32.mrb[0].mxu0
    %v2061 = vadd.f32 %v365, %v2060
    %v2062 = vpop.f32.mrb[0].mxu0
    %2063 = vmatprep.mubr.bf16.mxu0 0
    %2064 = vmatmul.mubr.bf16.gmra.mrb[0].mxu0 %v985
    %v2065 = vpop.f32.mrb[0].mxu0
    %v2066 = vadd.f32 %v365, %v2065
    %v2067 = vpop.f32.mrb[0].mxu0
    %v2068 = vpop.f32.mrb[0].mxu0
    %v2069 = vadd.f32 %v365, %v2068
    %v2070 = vpop.f32.mrb[0].mxu0
    %2071 = vmatprep.mubr.bf16.mxu0 0
    %2072 = vmatmul.mubr.bf16.gmra.mrb[0].mxu0 %v986
    %v2073 = vpop.f32.mrb[0].mxu0
    %v2074 = vadd.f32 %v365, %v2073
    %v2075 = vpop.f32.mrb[0].mxu0
    %v2076 = vpop.f32.mrb[0].mxu0
    %v2077 = vadd.f32 %v365, %v2076
    %v2078 = vpop.f32.mrb[0].mxu0
    %2079 = vmatprep.mubr.bf16.mxu0 0
    %2080 = vmatmul.mubr.bf16.gmra.mrb[0].mxu0 %v987
    %v2081 = vpop.f32.mrb[0].mxu0
    %v2082 = vadd.f32 %v365, %v2081
    %v2083 = vpop.f32.mrb[0].mxu0
    %v2084 = vpop.f32.mrb[0].mxu0
    %v2085 = vadd.f32 %v365, %v2084
    %v2086 = vpop.f32.mrb[0].mxu0
    %2087 = vmatprep.mubr.bf16.mxu0 0
    %2088 = vmatmul.mubr.bf16.gmra.mrb[0].mxu0 %v988
    %v2089 = vpop.f32.mrb[0].mxu0
    %v2090 = vadd.f32 %v365, %v2089
    %v2091 = vpop.f32.mrb[0].mxu0
    %v2092 = vpop.f32.mrb[0].mxu0
    %v2093 = vadd.f32 %v365, %v2092
    %v2094 = vpop.f32.mrb[0].mxu0
    %2095 = vmatprep.mubr.bf16.mxu0 0
    %2096 = vmatmul.mubr.bf16.gmra.mrb[0].mxu0 %v989
    %v2097 = vpop.f32.mrb[0].mxu0
    %v2098 = vadd.f32 %v365, %v2097
    %v2099 = vpop.f32.mrb[0].mxu0
    %v2100 = vpop.f32.mrb[0].mxu0
    %v2101 = vadd.f32 %v365, %v2100
    %v2102 = vpop.f32.mrb[0].mxu0
    %2103 = vmatprep.mubr.bf16.mxu0 0
    %2104 = vmatmul.mubr.bf16.gmra.mrb[0].mxu0 %v990
    %v2105 = vpop.f32.mrb[0].mxu0
    %v2106 = vadd.f32 %v365, %v2105
    %v2107 = vpop.f32.mrb[0].mxu0
    %v2108 = vpop.f32.mrb[0].mxu0
    %v2109 = vadd.f32 %v365, %v2108
    %v2110 = vpop.f32.mrb[0].mxu0
    %2111 = vmatprep.mubr.bf16.mxu0 0
    %2112 = vmatmul.mubr.bf16.gmra.mrb[0].mxu0 %v991
    %v2113 = vpop.f32.mrb[0].mxu0
    %v2114 = vadd.f32 %v365, %v2113
    %v2115 = vpop.f32.mrb[0].mxu0
    %v2116 = vpop.f32.mrb[0].mxu0
    %v2117 = vadd.f32 %v365, %v2116
    %v2118 = vpop.f32.mrb[0].mxu0
    %2119 = vmatprep.mubr.bf16.mxu0 0
    %2120 = vmatmul.mubr.bf16.gmra.mrb[0].mxu0 %v992
    %v2121 = vpop.f32.mrb[0].mxu0
    %v2122 = vadd.f32 %v365, %v2121
    %v2123 = vpop.f32.mrb[0].mxu0
    %v2124 = vpop.f32.mrb[0].mxu0
    %v2125 = vadd.f32 %v365, %v2124
    %v2126 = vpop.f32.mrb[0].mxu0
    %2127 = vmatprep.mubr.bf16.mxu0 0
    %2128 = vmatmul.mubr.bf16.gmra.mrb[0].mxu0 %v993
    %v2129 = vpop.f32.mrb[0].mxu0
    %v2130 = vadd.f32 %v365, %v2129
    %v2131 = vpop.f32.mrb[0].mxu0
    %v2132 = vpop.f32.mrb[0].mxu0
    %v2133 = vadd.f32 %v365, %v2132
    %v2134 = vpop.f32.mrb[0].mxu0
    %2135 = vmatprep.mubr.bf16.mxu0 0
    %2136 = vmatmul.mubr.bf16.gmra.mrb[0].mxu0 %v994
    %v2137 = vpop.f32.mrb[0].mxu0
    %v2138 = vadd.f32 %v365, %v2137
    %v2139 = vpop.f32.mrb[0].mxu0
    %v2140 = vpop.f32.mrb[0].mxu0
    %v2141 = vadd.f32 %v365, %v2140
    %v2142 = vpop.f32.mrb[0].mxu0
    %2143 = vmatprep.mubr.bf16.mxu0 0
    %2144 = vmatmul.mubr.bf16.gmra.mrb[0].mxu0 %v995
    %v2145 = vpop.f32.mrb[0].mxu0
    %v2146 = vadd.f32 %v365, %v2145
    %v2147 = vpop.f32.mrb[0].mxu0
    %v2148 = vpop.f32.mrb[0].mxu0
    %v2149 = vadd.f32 %v365, %v2148
    %v2150 = vpop.f32.mrb[0].mxu0
    %2151 = vmatprep.mubr.bf16.mxu0 0
    %2152 = vmatmul.mubr.bf16.gmra.mrb[0].mxu0 %v996
    %v2153 = vpop.f32.mrb[0].mxu0
    %v2154 = vadd.f32 %v365, %v2153
    %v2155 = vpop.f32.mrb[0].mxu0
    %v2156 = vpop.f32.mrb[0].mxu0
    %v2157 = vadd.f32 %v365, %v2156
    %v2158 = vpop.f32.mrb[0].mxu0
    %2159 = vmatprep.mubr.bf16.mxu0 0
    %2160 = vmatmul.mubr.bf16.gmra.mrb[0].mxu0 %v997
    %v2161 = vpop.f32.mrb[0].mxu0
    %v2162 = vadd.f32 %v365, %v2161
    %v2163 = vpop.f32.mrb[0].mxu0
    %v2164 = vpop.f32.mrb[0].mxu0
    %v2165 = vadd.f32 %v365, %v2164
    %v2166 = vpop.f32.mrb[0].mxu0
    %2167 = vmatprep.mubr.bf16.mxu0 0
    %2168 = vmatmul.mubr.bf16.gmra.mrb[0].mxu0 %v998
    %v2169 = vpop.f32.mrb[0].mxu0
    %v2170 = vadd.f32 %v365, %v2169
    %v2171 = vpop.f32.mrb[0].mxu0
    %v2172 = vpop.f32.mrb[0].mxu0
    %v2173 = vadd.f32 %v365, %v2172
    %v2174 = vpop.f32.mrb[0].mxu0
    %2175 = vmatprep.mubr.bf16.mxu0 0
    %2176 = vmatmul.mubr.bf16.gmra.mrb[0].mxu0 %v999
    %v2177 = vpop.f32.mrb[0].mxu0
    %v2178 = vadd.f32 %v365, %v2177
    %v2179 = vpop.f32.mrb[0].mxu0
    %v2180 = vpop.f32.mrb[0].mxu0
    %v2181 = vadd.f32 %v365, %v2180
    %v2182 = vpop.f32.mrb[0].mxu0
    %2183 = vmatprep.mubr.bf16.mxu0 0
    %2184 = vmatmul.mubr.bf16.gmra.mrb[0].mxu0 %v1000
    %v2185 = vpop.f32.mrb[0].mxu0
    %v2186 = vadd.f32 %v365, %v2185
    %v2187 = vpop.f32.mrb[0].mxu0
    %v2188 = vpop.f32.mrb[0].mxu0
    %v2189 = vadd.f32 %v365, %v2188
    %v2190 = vpop.f32.mrb[0].mxu0
    %2191 = vmatprep.mubr.bf16.mxu0 0
    %2192 = vmatmul.mubr.bf16.gmra.mrb[0].mxu0 %v1001
    %v2193 = vpop.f32.mrb[0].mxu0
    %v2194 = vadd.f32 %v365, %v2193
    %v2195 = vpop.f32.mrb[0].mxu0
    %v2196 = vpop.f32.mrb[0].mxu0
    %v2197 = vadd.f32 %v365, %v2196
    %v2198 = vpop.f32.mrb[0].mxu0
    %2199 = vmatprep.mubr.bf16.mxu0 0
    %2200 = vmatmul.mubr.bf16.gmra.mrb[0].mxu0 %v1002
    %v2201 = vpop.f32.mrb[0].mxu0
    %v2202 = vadd.f32 %v365, %v2201
    %v2203 = vpop.f32.mrb[0].mxu0
    %v2204 = vpop.f32.mrb[0].mxu0
    %v2205 = vadd.f32 %v365, %v2204
    %v2206 = vpop.f32.mrb[0].mxu0
    %2207 = vmatprep.mubr.bf16.mxu0 0
    %2208 = vmatmul.mubr.bf16.gmra.mrb[0].mxu0 %v1003
    %v2209 = vpop.f32.mrb[0].mxu0
    %v2210 = vadd.f32 %v365, %v2209
    %v2211 = vpop.f32.mrb[0].mxu0
    %v2212 = vpop.f32.mrb[0].mxu0
    %v2213 = vadd.f32 %v365, %v2212
    %v2214 = vpop.f32.mrb[0].mxu0
    %2215 = vmatprep.mubr.bf16.mxu0 0
    %2216 = vmatmul.mubr.bf16.gmra.mrb[0].mxu0 %v1004
    %v2217 = vpop.f32.mrb[0].mxu0
    %v2218 = vadd.f32 %v365, %v2217
    %v2219 = vpop.f32.mrb[0].mxu0
    %v2220 = vpop.f32.mrb[0].mxu0
    %v2221 = vadd.f32 %v365, %v2220
    %v2222 = vpop.f32.mrb[0].mxu0
    %2223 = vmatprep.mubr.bf16.mxu0 0
    %2224 = vmatmul.mubr.bf16.gmra.mrb[0].mxu0 %v1005
    %v2225 = vpop.f32.mrb[0].mxu0
    %v2226 = vadd.f32 %v365, %v2225
    %v2227 = vpop.f32.mrb[0].mxu0
    %v2228 = vpop.f32.mrb[0].mxu0
    %v2229 = vadd.f32 %v365, %v2228
    %v2230 = vpop.f32.mrb[0].mxu0
    %2231 = vmatprep.mubr.bf16.mxu0 0
    %2232 = vmatmul.mubr.bf16.gmra.mrb[0].mxu0 %v1006
    %v2233 = vpop.f32.mrb[0].mxu0
    %v2234 = vadd.f32 %v365, %v2233
    %v2235 = vpop.f32.mrb[0].mxu0
    %v2236 = vpop.f32.mrb[0].mxu0
    %v2237 = vadd.f32 %v365, %v2236
    %v2238 = vpop.f32.mrb[0].mxu0
    %2239 = vdwg.mxu0
    %v2240 = vmax.f32 %v1218, 0.0
    %v2241 = vmax.f32 %v1221, 0.0
    %v2242 = vmax.f32 %v1226, 0.0
    %v2243 = vmax.f32 %v1229, 0.0
    %v2244 = vmax.f32 %v1234, 0.0
    %v2245 = vmax.f32 %v1237, 0.0
    %v2246 = vmax.f32 %v1242, 0.0
    %v2247 = vmax.f32 %v1245, 0.0
    %v2248 = vmax.f32 %v1250, 0.0
    %v2249 = vmax.f32 %v1253, 0.0
    %v2250 = vmax.f32 %v1258, 0.0
    %v2251 = vmax.f32 %v1261, 0.0
    %v2252 = vmax.f32 %v1266, 0.0
    %v2253 = vmax.f32 %v1269, 0.0
    %v2254 = vmax.f32 %v1274, 0.0
    %v2255 = vmax.f32 %v1277, 0.0
    %v2256 = vmax.f32 %v1282, 0.0
    %v2257 = vmax.f32 %v1285, 0.0
    %v2258 = vmax.f32 %v1290, 0.0
    %v2259 = vmax.f32 %v1293, 0.0
    %v2260 = vmax.f32 %v1298, 0.0
    %v2261 = vmax.f32 %v1301, 0.0
    %v2262 = vmax.f32 %v1306, 0.0
    %v2263 = vmax.f32 %v1309, 0.0
    %v2264 = vmax.f32 %v1314, 0.0
    %v2265 = vmax.f32 %v1317, 0.0
    %v2266 = vmax.f32 %v1322, 0.0
    %v2267 = vmax.f32 %v1325, 0.0
    %v2268 = vmax.f32 %v1330, 0.0
    %v2269 = vmax.f32 %v1333, 0.0
    %v2270 = vmax.f32 %v1338, 0.0
    %v2271 = vmax.f32 %v1341, 0.0
    %v2272 = vmax.f32 %v1346, 0.0
    %v2273 = vmax.f32 %v1349, 0.0
    %v2274 = vmax.f32 %v1354, 0.0
    %v2275 = vmax.f32 %v1357, 0.0
    %v2276 = vmax.f32 %v1362, 0.0
    %v2277 = vmax.f32 %v1365, 0.0
    %v2278 = vmax.f32 %v1370, 0.0
    %v2279 = vmax.f32 %v1373, 0.0
    %v2280 = vmax.f32 %v1378, 0.0
    %v2281 = vmax.f32 %v1381, 0.0
    %v2282 = vmax.f32 %v1386, 0.0
    %v2283 = vmax.f32 %v1389, 0.0
    %v2284 = vmax.f32 %v1394, 0.0
    %v2285 = vmax.f32 %v1397, 0.0
    %v2286 = vmax.f32 %v1402, 0.0
    %v2287 = vmax.f32 %v1405, 0.0
    %v2288 = vmax.f32 %v1410, 0.0
    %v2289 = vmax.f32 %v1413, 0.0
    %v2290 = vmax.f32 %v1418, 0.0
    %v2291 = vmax.f32 %v1421, 0.0
    %v2292 = vmax.f32 %v1426, 0.0
    %v2293 = vmax.f32 %v1429, 0.0
    %v2294 = vmax.f32 %v1434, 0.0
    %v2295 = vmax.f32 %v1437, 0.0
    %v2296 = vmax.f32 %v1442, 0.0
    %v2297 = vmax.f32 %v1445, 0.0
    %v2298 = vmax.f32 %v1450, 0.0
    %v2299 = vmax.f32 %v1453, 0.0
    %v2300 = vmax.f32 %v1458, 0.0
    %v2301 = vmax.f32 %v1461, 0.0
    %v2302 = vmax.f32 %v1466, 0.0
    %v2303 = vmax.f32 %v1469, 0.0
    %v2304 = vmax.f32 %v1474, 0.0
    %v2305 = vmax.f32 %v1477, 0.0
    %v2306 = vmax.f32 %v1482, 0.0
    %v2307 = vmax.f32 %v1485, 0.0
    %v2308 = vmax.f32 %v1490, 0.0
    %v2309 = vmax.f32 %v1493, 0.0
    %v2310 = vmax.f32 %v1498, 0.0
    %v2311 = vmax.f32 %v1501, 0.0
    %v2312 = vmax.f32 %v1506, 0.0
    %v2313 = vmax.f32 %v1509, 0.0
    %v2314 = vmax.f32 %v1514, 0.0
    %v2315 = vmax.f32 %v1517, 0.0
    %v2316 = vmax.f32 %v1522, 0.0
    %v2317 = vmax.f32 %v1525, 0.0
    %v2318 = vmax.f32 %v1530, 0.0
    %v2319 = vmax.f32 %v1533, 0.0
    %v2320 = vmax.f32 %v1538, 0.0
    %v2321 = vmax.f32 %v1541, 0.0
    %v2322 = vmax.f32 %v1546, 0.0
    %v2323 = vmax.f32 %v1549, 0.0
    %v2324 = vmax.f32 %v1554, 0.0
    %v2325 = vmax.f32 %v1557, 0.0
    %v2326 = vmax.f32 %v1562, 0.0
    %v2327 = vmax.f32 %v1565, 0.0
    %v2328 = vmax.f32 %v1570, 0.0
    %v2329 = vmax.f32 %v1573, 0.0
    %v2330 = vmax.f32 %v1578, 0.0
    %v2331 = vmax.f32 %v1581, 0.0
    %v2332 = vmax.f32 %v1586, 0.0
    %v2333 = vmax.f32 %v1589, 0.0
    %v2334 = vmax.f32 %v1594, 0.0
    %v2335 = vmax.f32 %v1597, 0.0
    %v2336 = vmax.f32 %v1602, 0.0
    %v2337 = vmax.f32 %v1605, 0.0
    %v2338 = vmax.f32 %v1610, 0.0
    %v2339 = vmax.f32 %v1613, 0.0
    %v2340 = vmax.f32 %v1618, 0.0
    %v2341 = vmax.f32 %v1621, 0.0
    %v2342 = vmax.f32 %v1626, 0.0
    %v2343 = vmax.f32 %v1629, 0.0
    %v2344 = vmax.f32 %v1634, 0.0
    %v2345 = vmax.f32 %v1637, 0.0
    %v2346 = vmax.f32 %v1642, 0.0
    %v2347 = vmax.f32 %v1645, 0.0
    %v2348 = vmax.f32 %v1650, 0.0
    %v2349 = vmax.f32 %v1653, 0.0
    %v2350 = vmax.f32 %v1658, 0.0
    %v2351 = vmax.f32 %v1661, 0.0
    %v2352 = vmax.f32 %v1666, 0.0
    %v2353 = vmax.f32 %v1669, 0.0
    %v2354 = vmax.f32 %v1674, 0.0
    %v2355 = vmax.f32 %v1677, 0.0
    %v2356 = vmax.f32 %v1682, 0.0
    %v2357 = vmax.f32 %v1685, 0.0
    %v2358 = vmax.f32 %v1690, 0.0
    %v2359 = vmax.f32 %v1693, 0.0
    %v2360 = vmax.f32 %v1698, 0.0
    %v2361 = vmax.f32 %v1701, 0.0
    %v2362 = vmax.f32 %v1706, 0.0
    %v2363 = vmax.f32 %v1709, 0.0
    %v2364 = vmax.f32 %v1714, 0.0
    %v2365 = vmax.f32 %v1717, 0.0
    %v2366 = vmax.f32 %v1722, 0.0
    %v2367 = vmax.f32 %v1725, 0.0
    %v2368 = vmax.f32 %v1730, 0.0
    %v2369 = vmax.f32 %v1733, 0.0
    %v2370 = vmax.f32 %v1738, 0.0
    %v2371 = vmax.f32 %v1741, 0.0
    %v2372 = vmax.f32 %v1746, 0.0
    %v2373 = vmax.f32 %v1749, 0.0
    %v2374 = vmax.f32 %v1754, 0.0
    %v2375 = vmax.f32 %v1757, 0.0
    %v2376 = vmax.f32 %v1762, 0.0
    %v2377 = vmax.f32 %v1765, 0.0
    %v2378 = vmax.f32 %v1770, 0.0
    %v2379 = vmax.f32 %v1773, 0.0
    %v2380 = vmax.f32 %v1778, 0.0
    %v2381 = vmax.f32 %v1781, 0.0
    %v2382 = vmax.f32 %v1786, 0.0
    %v2383 = vmax.f32 %v1789, 0.0
    %v2384 = vmax.f32 %v1794, 0.0
    %v2385 = vmax.f32 %v1797, 0.0
    %v2386 = vmax.f32 %v1802, 0.0
    %v2387 = vmax.f32 %v1805, 0.0
    %v2388 = vmax.f32 %v1810, 0.0
    %v2389 = vmax.f32 %v1813, 0.0
    %v2390 = vmax.f32 %v1818, 0.0
    %v2391 = vmax.f32 %v1821, 0.0
    %v2392 = vmax.f32 %v1826, 0.0
    %v2393 = vmax.f32 %v1829, 0.0
    %v2394 = vmax.f32 %v1834, 0.0
    %v2395 = vmax.f32 %v1837, 0.0
    %v2396 = vmax.f32 %v1842, 0.0
    %v2397 = vmax.f32 %v1845, 0.0
    %v2398 = vmax.f32 %v1850, 0.0
    %v2399 = vmax.f32 %v1853, 0.0
    %v2400 = vmax.f32 %v1858, 0.0
    %v2401 = vmax.f32 %v1861, 0.0
    %v2402 = vmax.f32 %v1866, 0.0
    %v2403 = vmax.f32 %v1869, 0.0
    %v2404 = vmax.f32 %v1874, 0.0
    %v2405 = vmax.f32 %v1877, 0.0
    %v2406 = vmax.f32 %v1882, 0.0
    %v2407 = vmax.f32 %v1885, 0.0
    %v2408 = vmax.f32 %v1890, 0.0
    %v2409 = vmax.f32 %v1893, 0.0
    %v2410 = vmax.f32 %v1898, 0.0
    %v2411 = vmax.f32 %v1901, 0.0
    %v2412 = vmax.f32 %v1906, 0.0
    %v2413 = vmax.f32 %v1909, 0.0
    %v2414 = vmax.f32 %v1914, 0.0
    %v2415 = vmax.f32 %v1917, 0.0
    %v2416 = vmax.f32 %v1922, 0.0
    %v2417 = vmax.f32 %v1925, 0.0
    %v2418 = vmax.f32 %v1930, 0.0
    %v2419 = vmax.f32 %v1933, 0.0
    %v2420 = vmax.f32 %v1938, 0.0
    %v2421 = vmax.f32 %v1941, 0.0
    %v2422 = vmax.f32 %v1946, 0.0
    %v2423 = vmax.f32 %v1949, 0.0
    %v2424 = vmax.f32 %v1954, 0.0
    %v2425 = vmax.f32 %v1957, 0.0
    %v2426 = vmax.f32 %v1962, 0.0
    %v2427 = vmax.f32 %v1965, 0.0
    %v2428 = vmax.f32 %v1970, 0.0
    %v2429 = vmax.f32 %v1973, 0.0
    %v2430 = vmax.f32 %v1978, 0.0
    %v2431 = vmax.f32 %v1981, 0.0
    %v2432 = vmax.f32 %v1986, 0.0
    %v2433 = vmax.f32 %v1989, 0.0
    %v2434 = vmax.f32 %v1994, 0.0
    %v2435 = vmax.f32 %v1997, 0.0
    %v2436 = vmax.f32 %v2002, 0.0
    %v2437 = vmax.f32 %v2005, 0.0
    %v2438 = vmax.f32 %v2010, 0.0
    %v2439 = vmax.f32 %v2013, 0.0
    %v2440 = vmax.f32 %v2018, 0.0
    %v2441 = vmax.f32 %v2021, 0.0
    %v2442 = vmax.f32 %v2026, 0.0
    %v2443 = vmax.f32 %v2029, 0.0
    %v2444 = vmax.f32 %v2034, 0.0
    %v2445 = vmax.f32 %v2037, 0.0
    %v2446 = vmax.f32 %v2042, 0.0
    %v2447 = vmax.f32 %v2045, 0.0
    %v2448 = vmax.f32 %v2050, 0.0
    %v2449 = vmax.f32 %v2053, 0.0
    %v2450 = vmax.f32 %v2058, 0.0
    %v2451 = vmax.f32 %v2061, 0.0
    %v2452 = vmax.f32 %v2066, 0.0
    %v2453 = vmax.f32 %v2069, 0.0
    %v2454 = vmax.f32 %v2074, 0.0
    %v2455 = vmax.f32 %v2077, 0.0
    %v2456 = vmax.f32 %v2082, 0.0
    %v2457 = vmax.f32 %v2085, 0.0
    %v2458 = vmax.f32 %v2090, 0.0
    %v2459 = vmax.f32 %v2093, 0.0
    %v2460 = vmax.f32 %v2098, 0.0
    %v2461 = vmax.f32 %v2101, 0.0
    %v2462 = vmax.f32 %v2106, 0.0
    %v2463 = vmax.f32 %v2109, 0.0
    %v2464 = vmax.f32 %v2114, 0.0
    %v2465 = vmax.f32 %v2117, 0.0
    %v2466 = vmax.f32 %v2122, 0.0
    %v2467 = vmax.f32 %v2125, 0.0
    %v2468 = vmax.f32 %v2130, 0.0
    %v2469 = vmax.f32 %v2133, 0.0
    %v2470 = vmax.f32 %v2138, 0.0
    %v2471 = vmax.f32 %v2141, 0.0
    %v2472 = vmax.f32 %v2146, 0.0
    %v2473 = vmax.f32 %v2149, 0.0
    %v2474 = vmax.f32 %v2154, 0.0
    %v2475 = vmax.f32 %v2157, 0.0
    %v2476 = vmax.f32 %v2162, 0.0
    %v2477 = vmax.f32 %v2165, 0.0
    %v2478 = vmax.f32 %v2170, 0.0
    %v2479 = vmax.f32 %v2173, 0.0
    %v2480 = vmax.f32 %v2178, 0.0
    %v2481 = vmax.f32 %v2181, 0.0
    %v2482 = vmax.f32 %v2186, 0.0
    %v2483 = vmax.f32 %v2189, 0.0
    %v2484 = vmax.f32 %v2194, 0.0
    %v2485 = vmax.f32 %v2197, 0.0
    %v2486 = vmax.f32 %v2202, 0.0
    %v2487 = vmax.f32 %v2205, 0.0
    %v2488 = vmax.f32 %v2210, 0.0
    %v2489 = vmax.f32 %v2213, 0.0
    %v2490 = vmax.f32 %v2218, 0.0
    %v2491 = vmax.f32 %v2221, 0.0
    %v2492 = vmax.f32 %v2226, 0.0
    %v2493 = vmax.f32 %v2229, 0.0
    %v2494 = vmax.f32 %v2234, 0.0
    %v2495 = vmax.f32 %v2237, 0.0
    %v2496 = vld [vmem:[#allocation2] sm:$0xff]
    %v2497 = vadd.f32 %v2240, %v2241
    %v2498 = vadd.f32 %v2497, %v2242
    %v2499 = vadd.f32 %v2498, %v2243
    %v2500 = vadd.f32 %v2499, %v2244
    %v2501 = vadd.f32 %v2500, %v2245
    %v2502 = vadd.f32 %v2501, %v2246
    %v2503 = vadd.f32 %v2502, %v2247
    %v2504 = vadd.f32 %v2503, %v2248
    %v2505 = vadd.f32 %v2504, %v2249
    %v2506 = vadd.f32 %v2505, %v2250
    %v2507 = vadd.f32 %v2506, %v2251
    %v2508 = vadd.f32 %v2507, %v2252
    %v2509 = vadd.f32 %v2508, %v2253
    %v2510 = vadd.f32 %v2509, %v2254
    %v2511 = vadd.f32 %v2510, %v2255
    %v2512 = vadd.f32 %v2511, %v2256
    %v2513 = vadd.f32 %v2512, %v2257
    %v2514 = vadd.f32 %v2513, %v2258
    %v2515 = vadd.f32 %v2514, %v2259
    %v2516 = vadd.f32 %v2515, %v2260
    %v2517 = vadd.f32 %v2516, %v2261
    %v2518 = vadd.f32 %v2517, %v2262
    %v2519 = vadd.f32 %v2518, %v2263
    %v2520 = vadd.f32 %v2519, %v2264
    %v2521 = vadd.f32 %v2520, %v2265
    %v2522 = vadd.f32 %v2521, %v2266
    %v2523 = vadd.f32 %v2522, %v2267
    %v2524 = vadd.f32 %v2523, %v2268
    %v2525 = vadd.f32 %v2524, %v2269
    %v2526 = vadd.f32 %v2525, %v2270
    %v2527 = vadd.f32 %v2526, %v2271
    %v2528 = vrot.slane %v2527, 4
    %v2529 = vadd.f32 %v2527, %v2528
    %v2530 = vrot.slane %v2529, 2
    %v2531 = vadd.f32 %v2529, %v2530
    %v2532 = vrot.slane %v2531, 1
    %v2533 = vadd.f32 %v2531, %v2532
    %v2534 = vadd.f32 %v2272, %v2273
    %v2535 = vadd.f32 %v2534, %v2274
    %v2536 = vadd.f32 %v2535, %v2275
    %v2537 = vadd.f32 %v2536, %v2276
    %v2538 = vadd.f32 %v2537, %v2277
    %v2539 = vadd.f32 %v2538, %v2278
    %v2540 = vadd.f32 %v2539, %v2279
    %v2541 = vadd.f32 %v2540, %v2280
    %v2542 = vadd.f32 %v2541, %v2281
    %v2543 = vadd.f32 %v2542, %v2282
    %v2544 = vadd.f32 %v2543, %v2283
    %v2545 = vadd.f32 %v2544, %v2284
    %v2546 = vadd.f32 %v2545, %v2285
    %v2547 = vadd.f32 %v2546, %v2286
    %v2548 = vadd.f32 %v2547, %v2287
    %v2549 = vadd.f32 %v2548, %v2288
    %v2550 = vadd.f32 %v2549, %v2289
    %v2551 = vadd.f32 %v2550, %v2290
    %v2552 = vadd.f32 %v2551, %v2291
    %v2553 = vadd.f32 %v2552, %v2292
    %v2554 = vadd.f32 %v2553, %v2293
    %v2555 = vadd.f32 %v2554, %v2294
    %v2556 = vadd.f32 %v2555, %v2295
    %v2557 = vadd.f32 %v2556, %v2296
    %v2558 = vadd.f32 %v2557, %v2297
    %v2559 = vadd.f32 %v2558, %v2298
    %v2560 = vadd.f32 %v2559, %v2299
    %v2561 = vadd.f32 %v2560, %v2300
    %v2562 = vadd.f32 %v2561, %v2301
    %v2563 = vadd.f32 %v2562, %v2302
    %v2564 = vadd.f32 %v2563, %v2303
    %v2565 = vrot.slane %v2564, 4
    %v2566 = vadd.f32 %v2564, %v2565
    %v2567 = vrot.slane %v2566, 2
    %v2568 = vadd.f32 %v2566, %v2567
    %v2569 = vrot.slane %v2568, 1
    %v2570 = vadd.f32 %v2568, %v2569
    %v2571 = vadd.f32 %v2304, %v2305
    %v2572 = vadd.f32 %v2571, %v2306
    %v2573 = vadd.f32 %v2572, %v2307
    %v2574 = vadd.f32 %v2573, %v2308
    %v2575 = vadd.f32 %v2574, %v2309
    %v2576 = vadd.f32 %v2575, %v2310
    %v2577 = vadd.f32 %v2576, %v2311
    %v2578 = vadd.f32 %v2577, %v2312
    %v2579 = vadd.f32 %v2578, %v2313
    %v2580 = vadd.f32 %v2579, %v2314
    %v2581 = vadd.f32 %v2580, %v2315
    %v2582 = vadd.f32 %v2581, %v2316
    %v2583 = vadd.f32 %v2582, %v2317
    %v2584 = vadd.f32 %v2583, %v2318
    %v2585 = vadd.f32 %v2584, %v2319
    %v2586 = vadd.f32 %v2585, %v2320
    %v2587 = vadd.f32 %v2586, %v2321
    %v2588 = vadd.f32 %v2587, %v2322
    %v2589 = vadd.f32 %v2588, %v2323
    %v2590 = vadd.f32 %v2589, %v2324
    %v2591 = vadd.f32 %v2590, %v2325
    %v2592 = vadd.f32 %v2591, %v2326
    %v2593 = vadd.f32 %v2592, %v2327
    %v2594 = vadd.f32 %v2593, %v2328
    %v2595 = vadd.f32 %v2594, %v2329
    %v2596 = vadd.f32 %v2595, %v2330
    %v2597 = vadd.f32 %v2596, %v2331
    %v2598 = vadd.f32 %v2597, %v2332
    %v2599 = vadd.f32 %v2598, %v2333
    %v2600 = vadd.f32 %v2599, %v2334
    %v2601 = vadd.f32 %v2600, %v2335
    %v2602 = vrot.slane %v2601, 4
    %v2603 = vadd.f32 %v2601, %v2602
    %v2604 = vrot.slane %v2603, 2
    %v2605 = vadd.f32 %v2603, %v2604
    %v2606 = vrot.slane %v2605, 1
    %v2607 = vadd.f32 %v2605, %v2606
    %v2608 = vadd.f32 %v2336, %v2337
    %v2609 = vadd.f32 %v2608, %v2338
    %v2610 = vadd.f32 %v2609, %v2339
    %v2611 = vadd.f32 %v2610, %v2340
    %v2612 = vadd.f32 %v2611, %v2341
    %v2613 = vadd.f32 %v2612, %v2342
    %v2614 = vadd.f32 %v2613, %v2343
    %v2615 = vadd.f32 %v2614, %v2344
    %v2616 = vadd.f32 %v2615, %v2345
    %v2617 = vadd.f32 %v2616, %v2346
    %v2618 = vadd.f32 %v2617, %v2347
    %v2619 = vadd.f32 %v2618, %v2348
    %v2620 = vadd.f32 %v2619, %v2349
    %v2621 = vadd.f32 %v2620, %v2350
    %v2622 = vadd.f32 %v2621, %v2351
    %v2623 = vadd.f32 %v2622, %v2352
    %v2624 = vadd.f32 %v2623, %v2353
    %v2625 = vadd.f32 %v2624, %v2354
    %v2626 = vadd.f32 %v2625, %v2355
    %v2627 = vadd.f32 %v2626, %v2356
    %v2628 = vadd.f32 %v2627, %v2357
    %v2629 = vadd.f32 %v2628, %v2358
    %v2630 = vadd.f32 %v2629, %v2359
    %v2631 = vadd.f32 %v2630, %v2360
    %v2632 = vadd.f32 %v2631, %v2361
    %v2633 = vadd.f32 %v2632, %v2362
    %v2634 = vadd.f32 %v2633, %v2363
    %v2635 = vadd.f32 %v2634, %v2364
    %v2636 = vadd.f32 %v2635, %v2365
    %v2637 = vadd.f32 %v2636, %v2366
    %v2638 = vadd.f32 %v2637, %v2367
    %v2639 = vrot.slane %v2638, 4
    %v2640 = vadd.f32 %v2638, %v2639
    %v2641 = vrot.slane %v2640, 2
    %v2642 = vadd.f32 %v2640, %v2641
    %v2643 = vrot.slane %v2642, 1
    %v2644 = vadd.f32 %v2642, %v2643
    %v2645 = vadd.f32 %v2368, %v2369
    %v2646 = vadd.f32 %v2645, %v2370
    %v2647 = vadd.f32 %v2646, %v2371
    %v2648 = vadd.f32 %v2647, %v2372
    %v2649 = vadd.f32 %v2648, %v2373
    %v2650 = vadd.f32 %v2649, %v2374
    %v2651 = vadd.f32 %v2650, %v2375
    %v2652 = vadd.f32 %v2651, %v2376
    %v2653 = vadd.f32 %v2652, %v2377
    %v2654 = vadd.f32 %v2653, %v2378
    %v2655 = vadd.f32 %v2654, %v2379
    %v2656 = vadd.f32 %v2655, %v2380
    %v2657 = vadd.f32 %v2656, %v2381
    %v2658 = vadd.f32 %v2657, %v2382
    %v2659 = vadd.f32 %v2658, %v2383
    %v2660 = vadd.f32 %v2659, %v2384
    %v2661 = vadd.f32 %v2660, %v2385
    %v2662 = vadd.f32 %v2661, %v2386
    %v2663 = vadd.f32 %v2662, %v2387
    %v2664 = vadd.f32 %v2663, %v2388
    %v2665 = vadd.f32 %v2664, %v2389
    %v2666 = vadd.f32 %v2665, %v2390
    %v2667 = vadd.f32 %v2666, %v2391
    %v2668 = vadd.f32 %v2667, %v2392
    %v2669 = vadd.f32 %v2668, %v2393
    %v2670 = vadd.f32 %v2669, %v2394
    %v2671 = vadd.f32 %v2670, %v2395
    %v2672 = vadd.f32 %v2671, %v2396
    %v2673 = vadd.f32 %v2672, %v2397
    %v2674 = vadd.f32 %v2673, %v2398
    %v2675 = vadd.f32 %v2674, %v2399
    %v2676 = vrot.slane %v2675, 4
    %v2677 = vadd.f32 %v2675, %v2676
    %v2678 = vrot.slane %v2677, 2
    %v2679 = vadd.f32 %v2677, %v2678
    %v2680 = vrot.slane %v2679, 1
    %v2681 = vadd.f32 %v2679, %v2680
    %v2682 = vadd.f32 %v2400, %v2401
    %v2683 = vadd.f32 %v2682, %v2402
    %v2684 = vadd.f32 %v2683, %v2403
    %v2685 = vadd.f32 %v2684, %v2404
    %v2686 = vadd.f32 %v2685, %v2405
    %v2687 = vadd.f32 %v2686, %v2406
    %v2688 = vadd.f32 %v2687, %v2407
    %v2689 = vadd.f32 %v2688, %v2408
    %v2690 = vadd.f32 %v2689, %v2409
    %v2691 = vadd.f32 %v2690, %v2410
    %v2692 = vadd.f32 %v2691, %v2411
    %v2693 = vadd.f32 %v2692, %v2412
    %v2694 = vadd.f32 %v2693, %v2413
    %v2695 = vadd.f32 %v2694, %v2414
    %v2696 = vadd.f32 %v2695, %v2415
    %v2697 = vadd.f32 %v2696, %v2416
    %v2698 = vadd.f32 %v2697, %v2417
    %v2699 = vadd.f32 %v2698, %v2418
    %v2700 = vadd.f32 %v2699, %v2419
    %v2701 = vadd.f32 %v2700, %v2420
    %v2702 = vadd.f32 %v2701, %v2421
    %v2703 = vadd.f32 %v2702, %v2422
    %v2704 = vadd.f32 %v2703, %v2423
    %v2705 = vadd.f32 %v2704, %v2424
    %v2706 = vadd.f32 %v2705, %v2425
    %v2707 = vadd.f32 %v2706, %v2426
    %v2708 = vadd.f32 %v2707, %v2427
    %v2709 = vadd.f32 %v2708, %v2428
    %v2710 = vadd.f32 %v2709, %v2429
    %v2711 = vadd.f32 %v2710, %v2430
    %v2712 = vadd.f32 %v2711, %v2431
    %v2713 = vrot.slane %v2712, 4
    %v2714 = vadd.f32 %v2712, %v2713
    %v2715 = vrot.slane %v2714, 2
    %v2716 = vadd.f32 %v2714, %v2715
    %v2717 = vrot.slane %v2716, 1
    %v2718 = vadd.f32 %v2716, %v2717
    %v2719 = vadd.f32 %v2432, %v2433
    %v2720 = vadd.f32 %v2719, %v2434
    %v2721 = vadd.f32 %v2720, %v2435
    %v2722 = vadd.f32 %v2721, %v2436
    %v2723 = vadd.f32 %v2722, %v2437
    %v2724 = vadd.f32 %v2723, %v2438
    %v2725 = vadd.f32 %v2724, %v2439
    %v2726 = vadd.f32 %v2725, %v2440
    %v2727 = vadd.f32 %v2726, %v2441
    %v2728 = vadd.f32 %v2727, %v2442
    %v2729 = vadd.f32 %v2728, %v2443
    %v2730 = vadd.f32 %v2729, %v2444
    %v2731 = vadd.f32 %v2730, %v2445
    %v2732 = vadd.f32 %v2731, %v2446
    %v2733 = vadd.f32 %v2732, %v2447
    %v2734 = vadd.f32 %v2733, %v2448
    %v2735 = vadd.f32 %v2734, %v2449
    %v2736 = vadd.f32 %v2735, %v2450
    %v2737 = vadd.f32 %v2736, %v2451
    %v2738 = vadd.f32 %v2737, %v2452
    %v2739 = vadd.f32 %v2738, %v2453
    %v2740 = vadd.f32 %v2739, %v2454
    %v2741 = vadd.f32 %v2740, %v2455
    %v2742 = vadd.f32 %v2741, %v2456
    %v2743 = vadd.f32 %v2742, %v2457
    %v2744 = vadd.f32 %v2743, %v2458
    %v2745 = vadd.f32 %v2744, %v2459
    %v2746 = vadd.f32 %v2745, %v2460
    %v2747 = vadd.f32 %v2746, %v2461
    %v2748 = vadd.f32 %v2747, %v2462
    %v2749 = vadd.f32 %v2748, %v2463
    %v2750 = vrot.slane %v2749, 4
    %v2751 = vadd.f32 %v2749, %v2750
    %v2752 = vrot.slane %v2751, 2
    %v2753 = vadd.f32 %v2751, %v2752
    %v2754 = vrot.slane %v2753, 1
    %v2755 = vadd.f32 %v2753, %v2754
    %v2756 = vadd.f32 %v2464, %v2465
    %v2757 = vadd.f32 %v2756, %v2466
    %v2758 = vadd.f32 %v2757, %v2467
    %v2759 = vadd.f32 %v2758, %v2468
    %v2760 = vadd.f32 %v2759, %v2469
    %v2761 = vadd.f32 %v2760, %v2470
    %v2762 = vadd.f32 %v2761, %v2471
    %v2763 = vadd.f32 %v2762, %v2472
    %v2764 = vadd.f32 %v2763, %v2473
    %v2765 = vadd.f32 %v2764, %v2474
    %v2766 = vadd.f32 %v2765, %v2475
    %v2767 = vadd.f32 %v2766, %v2476
    %v2768 = vadd.f32 %v2767, %v2477
    %v2769 = vadd.f32 %v2768, %v2478
    %v2770 = vadd.f32 %v2769, %v2479
    %v2771 = vadd.f32 %v2770, %v2480
    %v2772 = vadd.f32 %v2771, %v2481
    %v2773 = vadd.f32 %v2772, %v2482
    %v2774 = vadd.f32 %v2773, %v2483
    %v2775 = vadd.f32 %v2774, %v2484
    %v2776 = vadd.f32 %v2775, %v2485
    %v2777 = vadd.f32 %v2776, %v2486
    %v2778 = vadd.f32 %v2777, %v2487
    %v2779 = vadd.f32 %v2778, %v2488
    %v2780 = vadd.f32 %v2779, %v2489
    %v2781 = vadd.f32 %v2780, %v2490
    %v2782 = vadd.f32 %v2781, %v2491
    %v2783 = vadd.f32 %v2782, %v2492
    %v2784 = vadd.f32 %v2783, %v2493
    %v2785 = vadd.f32 %v2784, %v2494
    %v2786 = vadd.f32 %v2785, %v2495
    %v2787 = vrot.slane %v2786, 4
    %v2788 = vadd.f32 %v2786, %v2787
    %v2789 = vrot.slane %v2788, 2
    %v2790 = vadd.f32 %v2788, %v2789
    %v2791 = vrot.slane %v2790, 1
    %v2792 = vadd.f32 %v2790, %v2791
    %vm2801 = vcmask 1041409
    %v2802 = vsel %vm2801, %v2570, %v2533
    %vm2803 = vcmask 1042434
    %v2804 = vsel %vm2803, %v2607, %v2802
    %vm2805 = vcmask 1043459
    %v2806 = vsel %vm2805, %v2644, %v2804
    %vm2807 = vcmask 1044484
    %v2808 = vsel %vm2807, %v2681, %v2806
    %vm2809 = vcmask 1045509
    %v2810 = vsel %vm2809, %v2718, %v2808
    %vm2811 = vcmask 1046534
    %v2812 = vsel %vm2811, %v2755, %v2810
    %vm2813 = vcmask 1047559
    %v2814 = vsel %vm2813, %v2792, %v2812
    %v2816 = vadd.f32 %v2496, %v2814
    %2817 = vst [vmem:[#allocation2] sm:$0xff] %v2816
    // Predicated region
    $region50: #{tpu_custom_call.1} parent=1 // pred_check
      %p2818 = pneg %p83
    $region51: #{tpu_custom_call.1} parent=1 // pred_check_branch
      %2820 = sbr.rel (%p2818) target = $region53
    $region52: #{tpu_custom_call.1} parent=1 // pred_region
      %v2821 = vld [vmem:[#allocation2] sm:$0xff]
      %v2822 = vmul.f32 %v2821, 0.00390625
      %v2823 = vpack.c.bf16 %v2822, %v2822
      %v2824 = vld [vmem:[#allocation8] sm:$0xf]
      %v2825 = vld [vmem:[#allocation8 + $0x4] sm:$0xf]
      %v2826 = vld [vmem:[#allocation8 + $0x8] sm:$0xf]
      %v2827 = vld [vmem:[#allocation8 + $0xc] sm:$0xf]
      %v2828 = vld [vmem:[#allocation8 + $0x10] sm:$0xf]
      %v2829 = vld [vmem:[#allocation8 + $0x14] sm:$0xf]
      %v2830 = vld [vmem:[#allocation8 + $0x18] sm:$0xf]
      %v2831 = vld [vmem:[#allocation8 + $0x1c] sm:$0xf]
      %v2832 = vld [vmem:[#allocation8 + $0x20] sm:$0xf]
      %v2833 = vld [vmem:[#allocation8 + $0x24] sm:$0xf]
      %v2834 = vld [vmem:[#allocation8 + $0x28] sm:$0xf]
      %v2835 = vld [vmem:[#allocation8 + $0x2c] sm:$0xf]
      %v2836 = vld [vmem:[#allocation8 + $0x30] sm:$0xf]
      %v2837 = vld [vmem:[#allocation8 + $0x34] sm:$0xf]
      %v2838 = vld [vmem:[#allocation8 + $0x38] sm:$0xf]
      %v2839 = vld [vmem:[#allocation8 + $0x3c] sm:$0xf]
      %v2840 = vld [vmem:[%s4] sm:$0x1]
      %v2842 = vlaneseq
      %v2843 = vshrl.u32 %v2842, 7
      %v2844 = vsub.s32 0, %v2843
      %v2845 = vrot.slane %v2840, %v2844
      %v2863 = vunpack.c.l.b16 %v2824
      %v2864 = vunpack.c.l.b16 %v2825
      %v2865 = vunpack.c.l.b16 %v2826
      %v2866 = vunpack.c.l.b16 %v2827
      %v2867 = vunpack.c.l.b16 %v2828
      %v2868 = vunpack.c.l.b16 %v2829
      %v2869 = vunpack.c.l.b16 %v2830
      %v2870 = vunpack.c.l.b16 %v2831
      %v2871 = vunpack.c.l.b16 %v2832
      %v2872 = vunpack.c.l.b16 %v2833
      %v2873 = vunpack.c.l.b16 %v2834
      %v2874 = vunpack.c.l.b16 %v2835
      %v2875 = vunpack.c.l.b16 %v2836
      %v2876 = vunpack.c.l.b16 %v2837
      %v2877 = vunpack.c.l.b16 %v2838
      %v2878 = vunpack.c.l.b16 %v2839
      %v2879 = vpack.c.b16 %v2864, %v2863
      %v2880 = vpack.c.b16 %v2866, %v2865
      %v2881 = vpack.c.b16 %v2868, %v2867
      %v2882 = vpack.c.b16 %v2870, %v2869
      %v2883 = vpack.c.b16 %v2872, %v2871
      %v2884 = vpack.c.b16 %v2874, %v2873
      %v2885 = vpack.c.b16 %v2876, %v2875
      %v2886 = vpack.c.b16 %v2878, %v2877
      %2895 = vmatprep.subr.bf16.mxu0 0
      %2896 = vmatpush1.bf16.msra.mxu0 %v2879
      %2897 = vmatprep.subr.bf16.mxu0 0
      %2898 = vmatpush1.bf16.msra.mxu0 %v2880
      %2899 = vmatprep.subr.bf16.mxu0 0
      %2900 = vmatpush1.bf16.msra.mxu0 %v2881
      %2901 = vmatprep.subr.bf16.mxu0 0
      %2902 = vmatpush1.bf16.msra.mxu0 %v2882
      %2903 = vmatprep.subr.bf16.mxu0 0
      %2904 = vmatpush1.bf16.msra.mxu0 %v2883
      %2905 = vmatprep.subr.bf16.mxu0 0
      %2906 = vmatpush1.bf16.msra.mxu0 %v2884
      %2907 = vmatprep.subr.bf16.mxu0 0
      %2908 = vmatpush1.bf16.msra.mxu0 %v2885
      %2909 = vmatprep.subr.bf16.mxu0 0
      %2910 = vmatpush1.bf16.msra.mxu0 %v2886
      %2911 = vmatprep.subr.bf16.mxu0 0
      %2912 = vmatpush1.bf16.msra.mxu0 0
      %2913 = vmatprep.subr.bf16.mxu0 0
      %2914 = vmatpush1.bf16.msra.mxu0 0
      %2915 = vmatprep.subr.bf16.mxu0 0
      %2916 = vmatpush1.bf16.msra.mxu0 0
      %2917 = vmatprep.subr.bf16.mxu0 0
      %2918 = vmatpush1.bf16.msra.mxu0 0
      %2919 = vmatprep.subr.bf16.mxu0 0
      %2920 = vmatpush1.bf16.msra.mxu0 0
      %2921 = vmatprep.subr.bf16.mxu0 0
      %2922 = vmatpush1.bf16.msra.mxu0 0
      %2923 = vmatprep.subr.bf16.mxu0 0
      %2924 = vmatpush1.bf16.msra.mxu0 0
      %2925 = vmatprep.subr.bf16.mxu0 0
      %2926 = vmatpush1.bf16.msra.mxu0 0
      %2927 = vmatprep.mubr.bf16.mxu0 0
      %2928 = vmatmul.mubr.bf16.gmra.mrb[0].mxu0 %v2823
      %v2929 = vpop.f32.mrb[0].mxu0
      %v2930 = vadd.f32 %v2845, %v2929
      %v2931 = vpop.f32.mrb[0].mxu0
      %v2932 = vpop.f32.mrb[0].mxu0
      %v2933 = vpop.f32.mrb[0].mxu0
      %2934 = vdwg.mxu0
      %v2935 = vmax.f32 %v2930, 0.0
      %v2936 = vpack.c.bf16 %v2935, %v2935
      %v2937 = vld [vmem:[#allocation9] sm:$0xf]
      %v2938 = vld [vmem:[#allocation9 + $0x4] sm:$0xf]
      %v2939 = vld [vmem:[#allocation9 + $0x8] sm:$0xf]
      %v2940 = vld [vmem:[#allocation9 + $0xc] sm:$0xf]
      %v2941 = vld [vmem:[#allocation9 + $0x10] sm:$0xf]
      %v2942 = vld [vmem:[#allocation9 + $0x14] sm:$0xf]
      %v2943 = vld [vmem:[#allocation9 + $0x18] sm:$0xf]
      %v2944 = vld [vmem:[#allocation9 + $0x1c] sm:$0xf]
      %v2945 = vld [vmem:[#allocation9 + $0x20] sm:$0xf]
      %v2946 = vld [vmem:[#allocation9 + $0x24] sm:$0xf]
      %v2947 = vld [vmem:[#allocation9 + $0x28] sm:$0xf]
      %v2948 = vld [vmem:[#allocation9 + $0x2c] sm:$0xf]
      %v2949 = vld [vmem:[#allocation9 + $0x30] sm:$0xf]
      %v2950 = vld [vmem:[#allocation9 + $0x34] sm:$0xf]
      %v2951 = vld [vmem:[#allocation9 + $0x38] sm:$0xf]
      %v2952 = vld [vmem:[#allocation9 + $0x3c] sm:$0xf]
      %v2953 = vld [vmem:[%s6] sm:$0x1]
      %v2955 = vlaneseq
      %v2956 = vshrl.u32 %v2955, 7
      %v2957 = vsub.s32 0, %v2956
      %v2958 = vrot.slane %v2953, %v2957
      %v2976 = vunpack.c.l.b16 %v2937
      %v2977 = vunpack.c.l.b16 %v2938
      %v2978 = vunpack.c.l.b16 %v2939
      %v2979 = vunpack.c.l.b16 %v2940
      %v2980 = vunpack.c.l.b16 %v2941
      %v2981 = vunpack.c.l.b16 %v2942
      %v2982 = vunpack.c.l.b16 %v2943
      %v2983 = vunpack.c.l.b16 %v2944
      %v2984 = vunpack.c.l.b16 %v2945
      %v2985 = vunpack.c.l.b16 %v2946
      %v2986 = vunpack.c.l.b16 %v2947
      %v2987 = vunpack.c.l.b16 %v2948
      %v2988 = vunpack.c.l.b16 %v2949
      %v2989 = vunpack.c.l.b16 %v2950
      %v2990 = vunpack.c.l.b16 %v2951
      %v2991 = vunpack.c.l.b16 %v2952
      %v2992 = vpack.c.b16 %v2977, %v2976
      %v2993 = vpack.c.b16 %v2979, %v2978
      %v2994 = vpack.c.b16 %v2981, %v2980
      %v2995 = vpack.c.b16 %v2983, %v2982
      %v2996 = vpack.c.b16 %v2985, %v2984
      %v2997 = vpack.c.b16 %v2987, %v2986
      %v2998 = vpack.c.b16 %v2989, %v2988
      %v2999 = vpack.c.b16 %v2991, %v2990
      %3008 = vmatprep.subr.bf16.mxu0 0
      %3009 = vmatpush1.bf16.msra.mxu0 %v2992
      %3010 = vmatprep.subr.bf16.mxu0 0
      %3011 = vmatpush1.bf16.msra.mxu0 %v2993
      %3012 = vmatprep.subr.bf16.mxu0 0
      %3013 = vmatpush1.bf16.msra.mxu0 %v2994
      %3014 = vmatprep.subr.bf16.mxu0 0
      %3015 = vmatpush1.bf16.msra.mxu0 %v2995
      %3016 = vmatprep.subr.bf16.mxu0 0
      %3017 = vmatpush1.bf16.msra.mxu0 %v2996
      %3018 = vmatprep.subr.bf16.mxu0 0
      %3019 = vmatpush1.bf16.msra.mxu0 %v2997
      %3020 = vmatprep.subr.bf16.mxu0 0
      %3021 = vmatpush1.bf16.msra.mxu0 %v2998
      %3022 = vmatprep.subr.bf16.mxu0 0
      %3023 = vmatpush1.bf16.msra.mxu0 %v2999
      %3024 = vmatprep.subr.bf16.mxu0 0
      %3025 = vmatpush1.bf16.msra.mxu0 0
      %3026 = vmatprep.subr.bf16.mxu0 0
      %3027 = vmatpush1.bf16.msra.mxu0 0
      %3028 = vmatprep.subr.bf16.mxu0 0
      %3029 = vmatpush1.bf16.msra.mxu0 0
      %3030 = vmatprep.subr.bf16.mxu0 0
      %3031 = vmatpush1.bf16.msra.mxu0 0
      %3032 = vmatprep.subr.bf16.mxu0 0
      %3033 = vmatpush1.bf16.msra.mxu0 0
      %3034 = vmatprep.subr.bf16.mxu0 0
      %3035 = vmatpush1.bf16.msra.mxu0 0
      %3036 = vmatprep.subr.bf16.mxu0 0
      %3037 = vmatpush1.bf16.msra.mxu0 0
      %3038 = vmatprep.subr.bf16.mxu0 0
      %3039 = vmatpush1.bf16.msra.mxu0 0
      %3040 = vmatprep.mubr.bf16.mxu0 0
      %3041 = vmatmul.mubr.bf16.gmra.mrb[0].mxu0 %v2936
      %v3042 = vpop.f32.mrb[0].mxu0
      %v3043 = vadd.f32 %v2958, %v3042
      %v3044 = vpop.f32.mrb[0].mxu0
      %v3045 = vpop.f32.mrb[0].mxu0
      %v3046 = vpop.f32.mrb[0].mxu0
      %3047 = vdwg.mxu0
      %3048 = vst [vmem:[#allocation11] sm:$0xff] %v3043
    $region53: #{tpu_custom_call.1} parent=1 // pred_fallthru
      _
    // Predicated region
    $region54: #{tpu_custom_call.1} parent=1 // pred_check
      _
    $region55: #{tpu_custom_call.1} parent=1 // pred_check_branch
      %3050 = sbr.rel (0) target = $region57
    $region56: #{tpu_custom_call.1} parent=1 // pred_region
      %s3052 = ssub.s32 128, 128
      %3053 = vsyncadd [#allocation5], %s3052
      %s3055 = sshll.u32 [#allocation11], 4
      %s3056 = int_to_ptr.vmem [resolvable:$true] %s3055
      %3058 = dma.vmem_to_hbm [thread:$0]  %s3056, 128, %s7, [#allocation5]
    $region57: #{tpu_custom_call.1} parent=1 // pred_fallthru
      _
    // Predicated region
    $region58: #{tpu_custom_call.1} parent=1 // pred_check
      _
    $region59: #{tpu_custom_call.1} parent=1 // pred_check_branch
      %3060 = sbr.rel (0) target = $region61
    $region60: #{tpu_custom_call.1} parent=1 // pred_region
      %3061 = dma.done [#allocation5], 128
    $region61: #{tpu_custom_call.1} parent=1 // pred_fallthru
      _
    %3062 = vsyncpa [#allocation4], 1
    %3063 = vsyncpa [#allocation7], 1
    %3064 = vsyncpa [#allocation10], 1
    %3065 = vsyncpa [#allocation5], 1

</llo_original>
